<compile_context>
chip_gen: v5e
topology: v5e:2x2
jax: 0.10.0
libtpu: 0.0.40
codegen_flags: <defaults>
</compile_context>

<pallas_src>
import functools

import jax
import jax.numpy as jnp
from jax import lax
from jax.experimental import pallas as pl
from jax.experimental.pallas import tpu as pltpu


# ----------------------------------------------------------------------------
# helpers
# ----------------------------------------------------------------------------
def sinusoidal_pos_enc(length, d_model):
    # TODO(synk): `self.pe` is never defined in the provided source; we reproduce
    # the Transformer-XL sinusoidal positional embedding (positions len-1 .. 0).
    pos = jnp.arange(length - 1, -1, -1, dtype=jnp.float32)
    inv_freq = 1.0 / (10000.0 ** (jnp.arange(0, d_model, 2, dtype=jnp.float32) / d_model))
    ang = pos[:, None] * inv_freq[None, :]
    return jnp.concatenate([jnp.sin(ang), jnp.cos(ang)], axis=-1)  # (K, E)


def _rel_shift(bd):
    """Exact JAX port of RelPositionMultiHeadAttention._rel_shift (reference only)."""
    B, H, T, K = bd.shape
    zp = jnp.zeros((B, H, T, 1), bd.dtype)
    p = jnp.concatenate([zp, bd], axis=-1).reshape(B, H, T * (K + 1))
    return p[:, :, T:].reshape(B, H, T, K)


# ----------------------------------------------------------------------------
# Fused kernel, grid = (B, H):
#   h == 0      : LayerNorm + fused QKV into persistent VMEM scratch
#   every h     : scores + in-VMEM rel-shift + mask + softmax + attn*V -> av scratch
#   h == H - 1  : single merged output projection + residual + single store
# ----------------------------------------------------------------------------
def _mhsa_fused_kernel(lens_ref, x_ref, ln_w_ref, ln_b_ref, wqkv_ref,
                       rwb_ref, rrb_ref, r_ref, wout_ref, out_ref,
                       qs_ref, ks_ref, vs_ref, av_ref,
                       *, n_head, d_head, eps, scale, use_strided_roll):
    b = pl.program_id(0)
    h = pl.program_id(1)
    hd = n_head * d_head

    # ---- once per batch row: LN + QKV, kept entirely in VMEM scratch ----
    @pl.when(h == 0)
    def _():
        xb = x_ref[0]                                            # (T, E) f32
        mean = jnp.mean(xb, axis=-1, keepdims=True)
        var = jnp.mean((xb - mean) ** 2, axis=-1, keepdims=True)
        xn = (xb - mean) * lax.rsqrt(var + eps)
        xn = xn * ln_w_ref[...] + ln_b_ref[...]                  # (T, E) f32
        qkv = jnp.dot(xn.astype(wqkv_ref.dtype), wqkv_ref[...],
                      preferred_element_type=jnp.float32)        # (T, 3*H*D) f32
        q = qkv[:, :hd] * scale                                  # 1/sqrt(D) folded into q
        k = qkv[:, hd:2 * hd]
        v = qkv[:, 2 * hd:]
        # Head-leading relayout (VMEM-local, once per batch row); avoids any
        # dynamic lane-dim slicing in the per-head phase.
        # TODO(synk): group 128//d_head heads per slab for lane-dense stores.
        for hh in range(n_head):
            sl = slice(hh * d_head, (hh + 1) * d_head)
            qs_ref[hh] = q[:, sl]
            ks_ref[hh] = k[:, sl].astype(ks_ref.dtype)
            vs_ref[hh] = v[:, sl].astype(vs_ref.dtype)

    # ---- per-head relative-position attention ----
    qh = qs_ref[h]                                               # (T, D) f32, scaled
    qac = (qh + rwb_ref[0]).astype(ks_ref.dtype)                 # bf16 MXU operands
    qbd = (qh + rrb_ref[0]).astype(ks_ref.dtype)
    kh = ks_ref[h]                                               # (K, D) bf16
    vh = vs_ref[h]                                               # (K, D) bf16
    rh = r_ref[0]                                                # (K, D) bf16

    dn = (((1,), (1,)), ((), ()))                                # contract last dims
    ac = lax.dot_general(qac, kh, dn, preferred_element_type=jnp.float32)   # (T, K)
    bd = lax.dot_general(qbd, rh, dn, preferred_element_type=jnp.float32)   # (T, K)

    T, K = ac.shape
    row = lax.broadcasted_iota(jnp.int32, (T, K), 0)
    col = lax.broadcasted_iota(jnp.int32, (T, K), 1)

    # ---- Transformer-XL relative shift, entirely in VMEM ----
    # shifted[i, j] = bd[i, K-1-i+j]  (j <= i);  0  (j == i+1);
    #                 bd[i+1, j-i-2]  (j >= i+2)
    # via C[i, j] = bd[i, (j - i - 1) mod K]  (per-row right rotation by i+1).
    if use_strided_roll:
        # Single strided XLU pass: row i rotated by 1 + i (mod K).
        # TODO(synk): fast path is shape-gated (K % 128 == 0); cross-check
        # against the static decomposition when enabling new shapes.
        c = pltpu.roll(bd, shift=1, axis=1, stride=1, stride_axis=0)
    else:
        # Small / unaligned K: log2(K) static rolls with per-row bit selects.
        shift_amt = jnp.where(row == K - 1, 0, row + 1)          # (i+1) mod K
        c = bd
        for bit in range(max(1, (K - 1).bit_length())):
            s = 1 << bit
            c = jnp.where((shift_amt & s) != 0, jnp.roll(c, s, axis=1), c)
    c_next = jnp.roll(c, -1, axis=0)                             # C[i+1, :] (wrap row unused)
    bd_shift = jnp.where(col == row + 1, 0.0,
                         jnp.where(col <= row, c, c_next))

    scores = ac + bd_shift                                       # scale already folded in
    scores = jnp.where(col >= lens_ref[b], -1e30, scores)        # key-side length mask

    m = jnp.max(scores, axis=-1, keepdims=True)                  # f32 softmax math
    e = jnp.exp(scores - m)
    p = e * pl.reciprocal(jnp.sum(e, axis=-1, keepdims=True), approx=True)

    av_ref[h] = jnp.dot(p.astype(vh.dtype), vh,
                        preferred_element_type=jnp.float32)      # (T, D) f32

    # ---- last head: merged output projection + residual, single store ----
    @pl.when(h == n_head - 1)
    def _():
        av = jnp.concatenate([av_ref[hh] for hh in range(n_head)], axis=1)  # (T, H*D)
        attn = jnp.dot(av.astype(wout_ref.dtype), wout_ref[...],
                       preferred_element_type=jnp.float32)       # (T, E)
        out_ref[0] = (x_ref[0] + attn).astype(out_ref.dtype)


# ----------------------------------------------------------------------------
# Wrapper: MHSAModule.forward
# ----------------------------------------------------------------------------
def mhsa_forward(x, lens, params, *, mxu_dtype=jnp.bfloat16):
    ln_w, ln_b, wqkv, wpos, wout, rwb, rrb = params
    B, T, E = x.shape
    H, D = rwb.shape
    HD = H * D
    K = T                       # mems=None -> len_k == len_seq
    scale = 1.0 / (D ** 0.5)

    # Hoisted, batch-independent positional projection; head-major (H, K, D)
    # so the kernel slices it per head purely via its BlockSpec.
    pos_enc = sinusoidal_pos_enc(K, E)
    r = jnp.dot(pos_enc, wpos, precision=lax.Precision.HIGHEST)
    r = r.reshape(K, H, D).transpose(1, 0, 2).astype(mxu_dtype)  # (H, K, D)

    kern = functools.partial(
        _mhsa_fused_kernel, n_head=H, d_head=D, eps=1e-5, scale=scale,
        use_strided_roll=(K % 128 == 0 and T % 8 == 0))

    out = pl.pallas_call(
        kern,
        out_shape=jax.ShapeDtypeStruct((B, T, E), x.dtype),
        grid_spec=pltpu.PrefetchScalarGridSpec(
            num_scalar_prefetch=1,                               # lens -> SMEM
            grid=(B, H),                                         # head axis is an accumulator
            in_specs=[
                pl.BlockSpec((1, T, E), lambda b, h, lens: (b, 0, 0)),   # x (LN + residual)
                pl.BlockSpec((1, E), lambda b, h, lens: (0, 0)),         # LN gamma
                pl.BlockSpec((1, E), lambda b, h, lens: (0, 0)),         # LN beta
                pl.BlockSpec((E, 3 * HD), lambda b, h, lens: (0, 0)),    # W_qkv (bf16)
                pl.BlockSpec((1, 1, D), lambda b, h, lens: (h, 0, 0)),   # r_w_bias * scale
                pl.BlockSpec((1, 1, D), lambda b, h, lens: (h, 0, 0)),   # r_r_bias * scale
                pl.BlockSpec((1, K, D), lambda b, h, lens: (h, 0, 0)),   # R (pos proj, bf16)
                pl.BlockSpec((HD, E), lambda b, h, lens: (0, 0)),        # W_out (bf16)
            ],
            out_specs=pl.BlockSpec((1, T, E), lambda b, h, lens: (b, 0, 0)),
            scratch_shapes=[
                pltpu.VMEM((H, T, D), jnp.float32),      # q * scale (persistent per batch row)
                pltpu.VMEM((H, K, D), mxu_dtype),        # k (bf16 MXU operand)
                pltpu.VMEM((H, K, D), mxu_dtype),        # v (bf16 MXU operand)
                pltpu.VMEM((H, T, D), jnp.float32),      # per-head attention vectors
            ]),
        compiler_params=pltpu.CompilerParams(
            dimension_semantics=("parallel", "arbitrary"),
            # Raise the default scoped-VMEM limit (16 MiB v5e / 32 MiB v6e,v7x)
            # so the full (T,K) score temporaries stay resident; stays under
            # v7x's 64 MiB physical.  TODO(synk): K-tile (flash) for v7x at
            # very long sequences.
            vmem_limit_bytes=48 * 1024 * 1024),
    )(lens, x,
      ln_w.reshape(1, E), ln_b.reshape(1, E),
      wqkv.astype(mxu_dtype),
      (rwb * scale).reshape(H, 1, D).astype(jnp.float32),
      (rrb * scale).reshape(H, 1, D).astype(jnp.float32),
      r, wout.astype(mxu_dtype))

    # MHSAModule.forward returns (x + attn_out, lens)
    return out, lens


# ----------------------------------------------------------------------------
# Pure-JAX reference (for verification)
# ----------------------------------------------------------------------------
def reference_forward(x, lens, params, pos_enc):
    ln_w, ln_b, wqkv, wpos, wout, rwb, rrb = params
    B, T, E = x.shape
    H, D = rwb.shape
    scale = 1.0 / (D ** 0.5)

    mean = x.mean(-1, keepdims=True)
    var = ((x - mean) ** 2).mean(-1, keepdims=True)
    xn = (x - mean) / jnp.sqrt(var + 1e-5) * ln_w + ln_b

    qkv = jnp.einsum('bte,ef->btf', xn, wqkv, precision='highest')
    q, k, v = jnp.split(qkv, 3, axis=-1)
    q = q.reshape(B, T, H, D)
    k = k.reshape(B, T, H, D)
    v4 = v.reshape(B, T, H, D)
    r = jnp.einsum('ke,ef->kf', pos_enc, wpos, precision='highest').reshape(T, H, D)

    ac = jnp.einsum('bind,bjnd->bnij', q + rwb, k, precision='highest')
    bd = jnp.einsum('bind,jnd->bnij', q + rrb, r, precision='highest')
    bd = _rel_shift(bd)

    score = (ac + bd) * scale
    mask = jnp.arange(T)[None, :] >= lens[:, None]               # (B, K)
    score = jnp.where(mask[:, None, None, :], -1e30, score)
    p = jax.nn.softmax(score, axis=-1)

    av = jnp.einsum('bnij,bjnd->bind', p, v4, precision='highest').reshape(B, T, H * D)
    attn_out = jnp.einsum('btf,fe->bte', av, wout, precision='highest')
    return x + attn_out


# ----------------------------------------------------------------------------
if __name__ == "__main__":
    B, T, E, H, D = 2, 8, 32, 4, 8   # idim=32, num_heads=4, d_head=8

    key = jax.random.PRNGKey(0)
    ks = jax.random.split(key, 8)
    ln_w = 1.0 + 0.1 * jax.random.normal(ks[0], (E,), jnp.float32)
    ln_b = 0.1 * jax.random.normal(ks[1], (E,), jnp.float32)
    wqkv = 0.1 * jax.random.normal(ks[2], (E, 3 * H * D), jnp.float32)   # call_qkv.weight.T
    wpos = 0.1 * jax.random.normal(ks[3], (E, H * D), jnp.float32)       # linearpos.weight.T
    wout = 0.1 * jax.random.normal(ks[4], (H * D, E), jnp.float32)       # linearout.weight.T
    rwb = 0.1 * jax.random.normal(ks[5], (H, D), jnp.float32)            # r_w_bias
    rrb = 0.1 * jax.random.normal(ks[6], (H, D), jnp.float32)            # r_r_bias
    params = (ln_w, ln_b, wqkv, wpos, wout, rwb, rrb)

    x = jax.random.normal(ks[7], (B, T, E), jnp.float32)
    lens = jnp.array([T, 5], jnp.int32)   # unequal lengths -> exercises the attn mask

    out, lens_out = mhsa_forward(x, lens, params)
    jax.block_until_ready(out)

    ref = reference_forward(x, lens, params, sinusoidal_pos_enc(T, E))
    max_err = float(jnp.max(jnp.abs(out - ref)))
    assert jnp.allclose(out, ref, rtol=2e-2, atol=2e-2), f"max abs err = {max_err}"

    print("KERNEL_OK")
</pallas_src>

<mosaic_0001>
module attributes {stable_mosaic.version = 11 : i64} {
  func.func @_mhsa_fused_kernel(%arg0: i32, %arg1: i32, %arg2: memref<2xi32, #tpu.memory_space<smem>>, %arg3: memref<1x8x32xf32, #tpu.memory_space<vmem>>, %arg4: memref<1x32xf32, #tpu.memory_space<vmem>>, %arg5: memref<1x32xf32, #tpu.memory_space<vmem>>, %arg6: memref<32x96xbf16, #tpu.memory_space<vmem>>, %arg7: memref<1x1x8xf32, #tpu.memory_space<vmem>>, %arg8: memref<1x1x8xf32, #tpu.memory_space<vmem>>, %arg9: memref<1x8x8xbf16, #tpu.memory_space<vmem>>, %arg10: memref<32x32xbf16, #tpu.memory_space<vmem>>, %arg11: memref<1x8x32xf32, #tpu.memory_space<vmem>>, %arg12: memref<4x8x8xf32, #tpu.memory_space<vmem>>, %arg13: memref<4x8x8xbf16, #tpu.memory_space<vmem>>, %arg14: memref<4x8x8xbf16, #tpu.memory_space<vmem>>, %arg15: memref<4x8x8xf32, #tpu.memory_space<vmem>>) attributes {dimension_semantics = [#tpu.dimension_semantics<parallel>, #tpu.dimension_semantics<arbitrary>], iteration_bounds = array<i64: 2, 4>, scalar_prefetch = 1 : i64, scratch_operands = 4 : i64, tpu.core_type = #tpu.core_type<tc>, window_params = [{transform_indices = @transform_0, window_bounds = array<i64: 1, 8, 32>}, {pipeline_mode = #tpu.pipeline_mode<synchronous>, transform_indices = @transform_1, window_bounds = array<i64: 1, 32>}, {pipeline_mode = #tpu.pipeline_mode<synchronous>, transform_indices = @transform_2, window_bounds = array<i64: 1, 32>}, {pipeline_mode = #tpu.pipeline_mode<synchronous>, transform_indices = @transform_3, window_bounds = array<i64: 32, 96>}, {transform_indices = @transform_4, window_bounds = array<i64: 1, 1, 8>}, {transform_indices = @transform_5, window_bounds = array<i64: 1, 1, 8>}, {transform_indices = @transform_6, window_bounds = array<i64: 1, 8, 8>}, {pipeline_mode = #tpu.pipeline_mode<synchronous>, transform_indices = @transform_7, window_bounds = array<i64: 32, 32>}, {transform_indices = @transform_8, window_bounds = array<i64: 1, 8, 32>}]} {
    %c0_i32 = arith.constant 0 : i32
    %0 = arith.cmpi eq, %arg1, %c0_i32 : i32
    %1 = arith.extui %0 : i1 to i32
    %c0_i32_0 = arith.constant 0 : i32
    %2 = arith.cmpi ne, %1, %c0_i32_0 : i32
    scf.if %2 {
      %c0_30 = arith.constant 0 : index
      %c0_31 = arith.constant 0 : index
      %c0_32 = arith.constant 0 : index
      %94 = vector.load %arg3[%c0_30, %c0_31, %c0_32] : memref<1x8x32xf32, #tpu.memory_space<vmem>>, vector<1x8x32xf32>
      %95 = vector.shape_cast %94 : vector<1x8x32xf32> to vector<8x32xf32>
      %cst_33 = arith.constant dense<0.000000e+00> : vector<8xf32>
      %96 = vector.multi_reduction <add>, %95, %cst_33 [1] : vector<8x32xf32> to vector<8xf32>
      %97 = vector.shape_cast %96 : vector<8xf32> to vector<8x1xf32>
      %cst_34 = arith.constant 3.200000e+01 : f32
      %98 = vector.broadcast %cst_34 : f32 to vector<8x1xf32>
      %99 = arith.divf %97, %98 : vector<8x1xf32>
      %100 = vector.broadcast %99 : vector<8x1xf32> to vector<8x32xf32>
      %101 = arith.subf %95, %100 : vector<8x32xf32>
      %102 = arith.mulf %101, %101 : vector<8x32xf32>
      %cst_35 = arith.constant dense<0.000000e+00> : vector<8xf32>
      %103 = vector.multi_reduction <add>, %102, %cst_35 [1] : vector<8x32xf32> to vector<8xf32>
      %104 = vector.shape_cast %103 : vector<8xf32> to vector<8x1xf32>
      %cst_36 = arith.constant 3.200000e+01 : f32
      %105 = vector.broadcast %cst_36 : f32 to vector<8x1xf32>
      %106 = arith.divf %104, %105 : vector<8x1xf32>
      %107 = vector.broadcast %99 : vector<8x1xf32> to vector<8x32xf32>
      %108 = arith.subf %95, %107 : vector<8x32xf32>
      %cst_37 = arith.constant 9.99999974E-6 : f32
      %109 = vector.broadcast %cst_37 : f32 to vector<8x1xf32>
      %110 = arith.addf %106, %109 : vector<8x1xf32>
      %111 = math.rsqrt %110 : vector<8x1xf32>
      %112 = vector.broadcast %111 : vector<8x1xf32> to vector<8x32xf32>
      %113 = arith.mulf %108, %112 : vector<8x32xf32>
      %c0_38 = arith.constant 0 : index
      %c0_39 = arith.constant 0 : index
      %114 = vector.load %arg4[%c0_38, %c0_39] : memref<1x32xf32, #tpu.memory_space<vmem>>, vector<1x32xf32>
      %115 = vector.broadcast %114 : vector<1x32xf32> to vector<8x32xf32>
      %116 = arith.mulf %113, %115 : vector<8x32xf32>
      %c0_40 = arith.constant 0 : index
      %c0_41 = arith.constant 0 : index
      %117 = vector.load %arg5[%c0_40, %c0_41] : memref<1x32xf32, #tpu.memory_space<vmem>>, vector<1x32xf32>
      %118 = vector.broadcast %117 : vector<1x32xf32> to vector<8x32xf32>
      %119 = arith.addf %116, %118 : vector<8x32xf32>
      %120 = arith.truncf %119 : vector<8x32xf32> to vector<8x32xbf16>
      %c0_42 = arith.constant 0 : index
      %c0_43 = arith.constant 0 : index
      %121 = vector.load %arg6[%c0_42, %c0_43] : memref<32x96xbf16, #tpu.memory_space<vmem>>, vector<32x96xbf16>
      %cst_44 = arith.constant dense<0.000000e+00> : vector<8x96xf32>
      %122 = tpu.matmul %120, %121, %cst_44 {dimension_numbers = #tpu.dot_dimension_numbers<[1], [0], [0], [1], [0, 0, 1, 1], [], []>} : vector<8x32xbf16>, vector<32x96xbf16>, vector<8x96xf32> -> vector<8x96xf32>
      %123 = vector.extract_strided_slice %122 {offsets = [0, 0], sizes = [8, 32], strides = [1, 1]} : vector<8x96xf32> to vector<8x32xf32>
      %cst_45 = arith.constant 0.353553385 : f32
      %124 = vector.broadcast %cst_45 : f32 to vector<8x32xf32>
      %125 = arith.mulf %123, %124 : vector<8x32xf32>
      %126 = vector.extract_strided_slice %122 {offsets = [0, 32], sizes = [8, 32], strides = [1, 1]} : vector<8x96xf32> to vector<8x32xf32>
      %127 = vector.extract_strided_slice %122 {offsets = [0, 64], sizes = [8, 32], strides = [1, 1]} : vector<8x96xf32> to vector<8x32xf32>
      %128 = vector.extract_strided_slice %125 {offsets = [0, 0], sizes = [8, 8], strides = [1, 1]} : vector<8x32xf32> to vector<8x8xf32>
      %c0_46 = arith.constant 0 : index
      %c0_47 = arith.constant 0 : index
      %c0_48 = arith.constant 0 : index
      %129 = vector.load %arg12[%c0_46, %c0_47, %c0_48] : memref<4x8x8xf32, #tpu.memory_space<vmem>>, vector<1x8x8xf32>
      %130 = vector.shape_cast %129 : vector<1x8x8xf32> to vector<8x8xf32>
      %131 = vector.shape_cast %128 : vector<8x8xf32> to vector<1x8x8xf32>
      tpu.vector_store %arg12[%c0_46, %c0_47, %c0_48], %131 {strides = array<i32>} : memref<4x8x8xf32, #tpu.memory_space<vmem>>, vector<1x8x8xf32>,
      %132 = vector.extract_strided_slice %126 {offsets = [0, 0], sizes = [8, 8], strides = [1, 1]} : vector<8x32xf32> to vector<8x8xf32>
      %133 = arith.truncf %132 : vector<8x8xf32> to vector<8x8xbf16>
      %c0_49 = arith.constant 0 : index
      %c0_50 = arith.constant 0 : index
      %c0_51 = arith.constant 0 : index
      %134 = vector.load %arg13[%c0_49, %c0_50, %c0_51] : memref<4x8x8xbf16, #tpu.memory_space<vmem>>, vector<1x8x8xbf16>
      %135 = vector.shape_cast %134 : vector<1x8x8xbf16> to vector<8x8xbf16>
      %136 = vector.shape_cast %133 : vector<8x8xbf16> to vector<1x8x8xbf16>
      tpu.vector_store %arg13[%c0_49, %c0_50, %c0_51], %136 {strides = array<i32>} : memref<4x8x8xbf16, #tpu.memory_space<vmem>>, vector<1x8x8xbf16>,
      %137 = vector.extract_strided_slice %127 {offsets = [0, 0], sizes = [8, 8], strides = [1, 1]} : vector<8x32xf32> to vector<8x8xf32>
      %138 = arith.truncf %137 : vector<8x8xf32> to vector<8x8xbf16>
      %c0_52 = arith.constant 0 : index
      %c0_53 = arith.constant 0 : index
      %c0_54 = arith.constant 0 : index
      %139 = vector.load %arg14[%c0_52, %c0_53, %c0_54] : memref<4x8x8xbf16, #tpu.memory_space<vmem>>, vector<1x8x8xbf16>
      %140 = vector.shape_cast %139 : vector<1x8x8xbf16> to vector<8x8xbf16>
      %141 = vector.shape_cast %138 : vector<8x8xbf16> to vector<1x8x8xbf16>
      tpu.vector_store %arg14[%c0_52, %c0_53, %c0_54], %141 {strides = array<i32>} : memref<4x8x8xbf16, #tpu.memory_space<vmem>>, vector<1x8x8xbf16>,
      %142 = vector.extract_strided_slice %125 {offsets = [0, 8], sizes = [8, 8], strides = [1, 1]} : vector<8x32xf32> to vector<8x8xf32>
      %c1 = arith.constant 1 : index
      %c0_55 = arith.constant 0 : index
      %c0_56 = arith.constant 0 : index
      %143 = vector.load %arg12[%c1, %c0_55, %c0_56] : memref<4x8x8xf32, #tpu.memory_space<vmem>>, vector<1x8x8xf32>
      %144 = vector.shape_cast %143 : vector<1x8x8xf32> to vector<8x8xf32>
      %145 = vector.shape_cast %142 : vector<8x8xf32> to vector<1x8x8xf32>
      tpu.vector_store %arg12[%c1, %c0_55, %c0_56], %145 {strides = array<i32>} : memref<4x8x8xf32, #tpu.memory_space<vmem>>, vector<1x8x8xf32>,
      %146 = vector.extract_strided_slice %126 {offsets = [0, 8], sizes = [8, 8], strides = [1, 1]} : vector<8x32xf32> to vector<8x8xf32>
      %147 = arith.truncf %146 : vector<8x8xf32> to vector<8x8xbf16>
      %c1_57 = arith.constant 1 : index
      %c0_58 = arith.constant 0 : index
      %c0_59 = arith.constant 0 : index
      %148 = vector.load %arg13[%c1_57, %c0_58, %c0_59] : memref<4x8x8xbf16, #tpu.memory_space<vmem>>, vector<1x8x8xbf16>
      %149 = vector.shape_cast %148 : vector<1x8x8xbf16> to vector<8x8xbf16>
      %150 = vector.shape_cast %147 : vector<8x8xbf16> to vector<1x8x8xbf16>
      tpu.vector_store %arg13[%c1_57, %c0_58, %c0_59], %150 {strides = array<i32>} : memref<4x8x8xbf16, #tpu.memory_space<vmem>>, vector<1x8x8xbf16>,
      %151 = vector.extract_strided_slice %127 {offsets = [0, 8], sizes = [8, 8], strides = [1, 1]} : vector<8x32xf32> to vector<8x8xf32>
      %152 = arith.truncf %151 : vector<8x8xf32> to vector<8x8xbf16>
      %c1_60 = arith.constant 1 : index
      %c0_61 = arith.constant 0 : index
      %c0_62 = arith.constant 0 : index
      %153 = vector.load %arg14[%c1_60, %c0_61, %c0_62] : memref<4x8x8xbf16, #tpu.memory_space<vmem>>, vector<1x8x8xbf16>
      %154 = vector.shape_cast %153 : vector<1x8x8xbf16> to vector<8x8xbf16>
      %155 = vector.shape_cast %152 : vector<8x8xbf16> to vector<1x8x8xbf16>
      tpu.vector_store %arg14[%c1_60, %c0_61, %c0_62], %155 {strides = array<i32>} : memref<4x8x8xbf16, #tpu.memory_space<vmem>>, vector<1x8x8xbf16>,
      %156 = vector.extract_strided_slice %125 {offsets = [0, 16], sizes = [8, 8], strides = [1, 1]} : vector<8x32xf32> to vector<8x8xf32>
      %c2 = arith.constant 2 : index
      %c0_63 = arith.constant 0 : index
      %c0_64 = arith.constant 0 : index
      %157 = vector.load %arg12[%c2, %c0_63, %c0_64] : memref<4x8x8xf32, #tpu.memory_space<vmem>>, vector<1x8x8xf32>
      %158 = vector.shape_cast %157 : vector<1x8x8xf32> to vector<8x8xf32>
      %159 = vector.shape_cast %156 : vector<8x8xf32> to vector<1x8x8xf32>
      tpu.vector_store %arg12[%c2, %c0_63, %c0_64], %159 {strides = array<i32>} : memref<4x8x8xf32, #tpu.memory_space<vmem>>, vector<1x8x8xf32>,
      %160 = vector.extract_strided_slice %126 {offsets = [0, 16], sizes = [8, 8], strides = [1, 1]} : vector<8x32xf32> to vector<8x8xf32>
      %161 = arith.truncf %160 : vector<8x8xf32> to vector<8x8xbf16>
      %c2_65 = arith.constant 2 : index
      %c0_66 = arith.constant 0 : index
      %c0_67 = arith.constant 0 : index
      %162 = vector.load %arg13[%c2_65, %c0_66, %c0_67] : memref<4x8x8xbf16, #tpu.memory_space<vmem>>, vector<1x8x8xbf16>
      %163 = vector.shape_cast %162 : vector<1x8x8xbf16> to vector<8x8xbf16>
      %164 = vector.shape_cast %161 : vector<8x8xbf16> to vector<1x8x8xbf16>
      tpu.vector_store %arg13[%c2_65, %c0_66, %c0_67], %164 {strides = array<i32>} : memref<4x8x8xbf16, #tpu.memory_space<vmem>>, vector<1x8x8xbf16>,
      %165 = vector.extract_strided_slice %127 {offsets = [0, 16], sizes = [8, 8], strides = [1, 1]} : vector<8x32xf32> to vector<8x8xf32>
      %166 = arith.truncf %165 : vector<8x8xf32> to vector<8x8xbf16>
      %c2_68 = arith.constant 2 : index
      %c0_69 = arith.constant 0 : index
      %c0_70 = arith.constant 0 : index
      %167 = vector.load %arg14[%c2_68, %c0_69, %c0_70] : memref<4x8x8xbf16, #tpu.memory_space<vmem>>, vector<1x8x8xbf16>
      %168 = vector.shape_cast %167 : vector<1x8x8xbf16> to vector<8x8xbf16>
      %169 = vector.shape_cast %166 : vector<8x8xbf16> to vector<1x8x8xbf16>
      tpu.vector_store %arg14[%c2_68, %c0_69, %c0_70], %169 {strides = array<i32>} : memref<4x8x8xbf16, #tpu.memory_space<vmem>>, vector<1x8x8xbf16>,
      %170 = vector.extract_strided_slice %125 {offsets = [0, 24], sizes = [8, 8], strides = [1, 1]} : vector<8x32xf32> to vector<8x8xf32>
      %c3 = arith.constant 3 : index
      %c0_71 = arith.constant 0 : index
      %c0_72 = arith.constant 0 : index
      %171 = vector.load %arg12[%c3, %c0_71, %c0_72] : memref<4x8x8xf32, #tpu.memory_space<vmem>>, vector<1x8x8xf32>
      %172 = vector.shape_cast %171 : vector<1x8x8xf32> to vector<8x8xf32>
      %173 = vector.shape_cast %170 : vector<8x8xf32> to vector<1x8x8xf32>
      tpu.vector_store %arg12[%c3, %c0_71, %c0_72], %173 {strides = array<i32>} : memref<4x8x8xf32, #tpu.memory_space<vmem>>, vector<1x8x8xf32>,
      %174 = vector.extract_strided_slice %126 {offsets = [0, 24], sizes = [8, 8], strides = [1, 1]} : vector<8x32xf32> to vector<8x8xf32>
      %175 = arith.truncf %174 : vector<8x8xf32> to vector<8x8xbf16>
      %c3_73 = arith.constant 3 : index
      %c0_74 = arith.constant 0 : index
      %c0_75 = arith.constant 0 : index
      %176 = vector.load %arg13[%c3_73, %c0_74, %c0_75] : memref<4x8x8xbf16, #tpu.memory_space<vmem>>, vector<1x8x8xbf16>
      %177 = vector.shape_cast %176 : vector<1x8x8xbf16> to vector<8x8xbf16>
      %178 = vector.shape_cast %175 : vector<8x8xbf16> to vector<1x8x8xbf16>
      tpu.vector_store %arg13[%c3_73, %c0_74, %c0_75], %178 {strides = array<i32>} : memref<4x8x8xbf16, #tpu.memory_space<vmem>>, vector<1x8x8xbf16>,
      %179 = vector.extract_strided_slice %127 {offsets = [0, 24], sizes = [8, 8], strides = [1, 1]} : vector<8x32xf32> to vector<8x8xf32>
      %180 = arith.truncf %179 : vector<8x8xf32> to vector<8x8xbf16>
      %c3_76 = arith.constant 3 : index
      %c0_77 = arith.constant 0 : index
      %c0_78 = arith.constant 0 : index
      %181 = vector.load %arg14[%c3_76, %c0_77, %c0_78] : memref<4x8x8xbf16, #tpu.memory_space<vmem>>, vector<1x8x8xbf16>
      %182 = vector.shape_cast %181 : vector<1x8x8xbf16> to vector<8x8xbf16>
      %183 = vector.shape_cast %180 : vector<8x8xbf16> to vector<1x8x8xbf16>
      tpu.vector_store %arg14[%c3_76, %c0_77, %c0_78], %183 {strides = array<i32>} : memref<4x8x8xbf16, #tpu.memory_space<vmem>>, vector<1x8x8xbf16>,
    } else {
    }
    %3 = arith.index_cast %arg1 : i32 to index
    %c0 = arith.constant 0 : index
    %c0_1 = arith.constant 0 : index
    %4 = vector.load %arg12[%3, %c0, %c0_1] : memref<4x8x8xf32, #tpu.memory_space<vmem>>, vector<1x8x8xf32>
    %5 = vector.shape_cast %4 : vector<1x8x8xf32> to vector<8x8xf32>
    %c0_2 = arith.constant 0 : index
    %c0_3 = arith.constant 0 : index
    %c0_4 = arith.constant 0 : index
    %6 = vector.load %arg7[%c0_2, %c0_3, %c0_4] : memref<1x1x8xf32, #tpu.memory_space<vmem>>, vector<1x1x8xf32>
    %7 = vector.shape_cast %6 : vector<1x1x8xf32> to vector<1x8xf32>
    %8 = vector.broadcast %7 : vector<1x8xf32> to vector<8x8xf32>
    %9 = arith.addf %5, %8 : vector<8x8xf32>
    %10 = arith.truncf %9 : vector<8x8xf32> to vector<8x8xbf16>
    %c0_5 = arith.constant 0 : index
    %c0_6 = arith.constant 0 : index
    %c0_7 = arith.constant 0 : index
    %11 = vector.load %arg8[%c0_5, %c0_6, %c0_7] : memref<1x1x8xf32, #tpu.memory_space<vmem>>, vector<1x1x8xf32>
    %12 = vector.shape_cast %11 : vector<1x1x8xf32> to vector<1x8xf32>
    %13 = vector.broadcast %12 : vector<1x8xf32> to vector<8x8xf32>
    %14 = arith.addf %5, %13 : vector<8x8xf32>
    %15 = arith.truncf %14 : vector<8x8xf32> to vector<8x8xbf16>
    %16 = arith.index_cast %arg1 : i32 to index
    %c0_8 = arith.constant 0 : index
    %c0_9 = arith.constant 0 : index
    %17 = vector.load %arg13[%16, %c0_8, %c0_9] : memref<4x8x8xbf16, #tpu.memory_space<vmem>>, vector<1x8x8xbf16>
    %18 = vector.shape_cast %17 : vector<1x8x8xbf16> to vector<8x8xbf16>
    %19 = arith.index_cast %arg1 : i32 to index
    %c0_10 = arith.constant 0 : index
    %c0_11 = arith.constant 0 : index
    %20 = vector.load %arg14[%19, %c0_10, %c0_11] : memref<4x8x8xbf16, #tpu.memory_space<vmem>>, vector<1x8x8xbf16>
    %21 = vector.shape_cast %20 : vector<1x8x8xbf16> to vector<8x8xbf16>
    %c0_12 = arith.constant 0 : index
    %c0_13 = arith.constant 0 : index
    %c0_14 = arith.constant 0 : index
    %22 = vector.load %arg9[%c0_12, %c0_13, %c0_14] : memref<1x8x8xbf16, #tpu.memory_space<vmem>>, vector<1x8x8xbf16>
    %23 = vector.shape_cast %22 : vector<1x8x8xbf16> to vector<8x8xbf16>
    %cst = arith.constant dense<0.000000e+00> : vector<8x8xf32>
    %24 = tpu.matmul %10, %18, %cst {dimension_numbers = #tpu.dot_dimension_numbers<[1], [1], [0], [0], [0, 0, 1, 0], [], []>} : vector<8x8xbf16>, vector<8x8xbf16>, vector<8x8xf32> -> vector<8x8xf32>
    %cst_15 = arith.constant dense<0.000000e+00> : vector<8x8xf32>
    %25 = tpu.matmul %15, %23, %cst_15 {dimension_numbers = #tpu.dot_dimension_numbers<[1], [1], [0], [0], [0, 0, 1, 0], [], []>} : vector<8x8xbf16>, vector<8x8xbf16>, vector<8x8xf32> -> vector<8x8xf32>
    %26 = tpu.iota {dimensions = array<i32: 0>} : vector<8x8xi32>
    %27 = tpu.iota {dimensions = array<i32: 1>} : vector<8x8xi32>
    %c7_i32 = arith.constant 7 : i32
    %28 = vector.broadcast %c7_i32 : i32 to vector<8x8xi32>
    %29 = arith.cmpi eq, %26, %28 : vector<8x8xi32>
    %c1_i32 = arith.constant 1 : i32
    %30 = vector.broadcast %c1_i32 : i32 to vector<8x8xi32>
    %31 = arith.addi %26, %30 : vector<8x8xi32>
    %c0_i32_16 = arith.constant 0 : i32
    %32 = vector.broadcast %c0_i32_16 : i32 to vector<8x8xi32>
    %33 = arith.select %29, %32, %31 : vector<8x8xi1>, vector<8x8xi32>
    %c1_i32_17 = arith.constant 1 : i32
    %34 = vector.broadcast %c1_i32_17 : i32 to vector<8x8xi32>
    %35 = arith.andi %33, %34 : vector<8x8xi32>
    %c0_i32_18 = arith.constant 0 : i32
    %36 = vector.broadcast %c0_i32_18 : i32 to vector<8x8xi32>
    %37 = arith.cmpi ne, %35, %36 : vector<8x8xi32>
    %38 = vector.extract_strided_slice %25 {offsets = [0, 7], sizes = [8, 1], strides = [1, 1]} : vector<8x8xf32> to vector<8x1xf32>
    %39 = vector.extract_strided_slice %25 {offsets = [0, 0], sizes = [8, 7], strides = [1, 1]} : vector<8x8xf32> to vector<8x7xf32>
    %40 = tpu.concatenate %38, %39 in 1 : vector<8x1xf32>, vector<8x7xf32> -> vector<8x8xf32>
    %41 = arith.select %37, %40, %25 : vector<8x8xi1>, vector<8x8xf32>
    %c2_i32 = arith.constant 2 : i32
    %42 = vector.broadcast %c2_i32 : i32 to vector<8x8xi32>
    %43 = arith.andi %33, %42 : vector<8x8xi32>
    %c0_i32_19 = arith.constant 0 : i32
    %44 = vector.broadcast %c0_i32_19 : i32 to vector<8x8xi32>
    %45 = arith.cmpi ne, %43, %44 : vector<8x8xi32>
    %46 = vector.extract_strided_slice %41 {offsets = [0, 6], sizes = [8, 2], strides = [1, 1]} : vector<8x8xf32> to vector<8x2xf32>
    %47 = vector.extract_strided_slice %41 {offsets = [0, 0], sizes = [8, 6], strides = [1, 1]} : vector<8x8xf32> to vector<8x6xf32>
    %48 = tpu.concatenate %46, %47 in 1 : vector<8x2xf32>, vector<8x6xf32> -> vector<8x8xf32>
    %49 = arith.select %45, %48, %41 : vector<8x8xi1>, vector<8x8xf32>
    %c4_i32 = arith.constant 4 : i32
    %50 = vector.broadcast %c4_i32 : i32 to vector<8x8xi32>
    %51 = arith.andi %33, %50 : vector<8x8xi32>
    %c0_i32_20 = arith.constant 0 : i32
    %52 = vector.broadcast %c0_i32_20 : i32 to vector<8x8xi32>
    %53 = arith.cmpi ne, %51, %52 : vector<8x8xi32>
    %54 = vector.extract_strided_slice %49 {offsets = [0, 4], sizes = [8, 4], strides = [1, 1]} : vector<8x8xf32> to vector<8x4xf32>
    %55 = vector.extract_strided_slice %49 {offsets = [0, 0], sizes = [8, 4], strides = [1, 1]} : vector<8x8xf32> to vector<8x4xf32>
    %56 = tpu.concatenate %54, %55 in 1 : vector<8x4xf32>, vector<8x4xf32> -> vector<8x8xf32>
    %57 = arith.select %53, %56, %49 : vector<8x8xi1>, vector<8x8xf32>
    %58 = vector.extract_strided_slice %57 {offsets = [1, 0], sizes = [7, 8], strides = [1, 1]} : vector<8x8xf32> to vector<7x8xf32>
    %59 = vector.extract_strided_slice %57 {offsets = [0, 0], sizes = [1, 8], strides = [1, 1]} : vector<8x8xf32> to vector<1x8xf32>
    %60 = tpu.concatenate %58, %59 in 0 : vector<7x8xf32>, vector<1x8xf32> -> vector<8x8xf32>
    %c1_i32_21 = arith.constant 1 : i32
    %61 = vector.broadcast %c1_i32_21 : i32 to vector<8x8xi32>
    %62 = arith.addi %26, %61 : vector<8x8xi32>
    %63 = arith.cmpi eq, %27, %62 : vector<8x8xi32>
    %64 = arith.cmpi sle, %27, %26 : vector<8x8xi32>
    %65 = arith.select %64, %57, %60 : vector<8x8xi1>, vector<8x8xf32>
    %cst_22 = arith.constant 0.000000e+00 : f32
    %66 = vector.broadcast %cst_22 : f32 to vector<8x8xf32>
    %67 = arith.select %63, %66, %65 : vector<8x8xi1>, vector<8x8xf32>
    %68 = arith.addf %24, %67 : vector<8x8xf32>
    %69 = arith.index_cast %arg0 : i32 to index
    %70 = memref.load %arg2[%69] : memref<2xi32, #tpu.memory_space<smem>>
    %71 = vector.broadcast %70 : i32 to vector<8x8xi32>
    %72 = arith.cmpi sge, %27, %71 : vector<8x8xi32>
    %cst_23 = arith.constant -1.000000e+30 : f32
    %73 = vector.broadcast %cst_23 : f32 to vector<8x8xf32>
    %74 = arith.select %72, %73, %68 : vector<8x8xi1>, vector<8x8xf32>
    %cst_24 = arith.constant dense<0xFF800000> : vector<8xf32>
    %75 = vector.multi_reduction <maximumf>, %74, %cst_24 [1] : vector<8x8xf32> to vector<8xf32>
    %76 = vector.shape_cast %75 : vector<8xf32> to vector<8x1xf32>
    %77 = vector.broadcast %76 : vector<8x1xf32> to vector<8x8xf32>
    %78 = arith.subf %74, %77 : vector<8x8xf32>
    %79 = math.exp %78 : vector<8x8xf32>
    %cst_25 = arith.constant dense<0.000000e+00> : vector<8xf32>
    %80 = vector.multi_reduction <add>, %79, %cst_25 [1] : vector<8x8xf32> to vector<8xf32>
    %81 = vector.shape_cast %80 : vector<8xf32> to vector<8x1xf32>
    %82 = tpu.reciprocal %81 {approx = true} : vector<8x1xf32> -> vector<8x1xf32>
    %83 = vector.broadcast %82 : vector<8x1xf32> to vector<8x8xf32>
    %84 = arith.mulf %79, %83 : vector<8x8xf32>
    %85 = arith.truncf %84 : vector<8x8xf32> to vector<8x8xbf16>
    %cst_26 = arith.constant dense<0.000000e+00> : vector<8x8xf32>
    %86 = tpu.matmul %85, %21, %cst_26 {dimension_numbers = #tpu.dot_dimension_numbers<[1], [0], [0], [1], [0, 0, 1, 1], [], []>} : vector<8x8xbf16>, vector<8x8xbf16>, vector<8x8xf32> -> vector<8x8xf32>
    %87 = arith.index_cast %arg1 : i32 to index
    %c0_27 = arith.constant 0 : index
    %c0_28 = arith.constant 0 : index
    %88 = vector.load %arg15[%87, %c0_27, %c0_28] : memref<4x8x8xf32, #tpu.memory_space<vmem>>, vector<1x8x8xf32>
    %89 = vector.shape_cast %88 : vector<1x8x8xf32> to vector<8x8xf32>
    %90 = vector.shape_cast %86 : vector<8x8xf32> to vector<1x8x8xf32>
    tpu.vector_store %arg15[%87, %c0_27, %c0_28], %90 {strides = array<i32>} : memref<4x8x8xf32, #tpu.memory_space<vmem>>, vector<1x8x8xf32>,
    %c3_i32 = arith.constant 3 : i32
    %91 = arith.cmpi eq, %arg1, %c3_i32 : i32
    %92 = arith.extui %91 : i1 to i32
    %c0_i32_29 = arith.constant 0 : i32
    %93 = arith.cmpi ne, %92, %c0_i32_29 : i32
    scf.if %93 {
      %c0_30 = arith.constant 0 : index
      %c0_31 = arith.constant 0 : index
      %c0_32 = arith.constant 0 : index
      %94 = vector.load %arg15[%c0_30, %c0_31, %c0_32] : memref<4x8x8xf32, #tpu.memory_space<vmem>>, vector<1x8x8xf32>
      %95 = vector.shape_cast %94 : vector<1x8x8xf32> to vector<8x8xf32>
      %c1 = arith.constant 1 : index
      %c0_33 = arith.constant 0 : index
      %c0_34 = arith.constant 0 : index
      %96 = vector.load %arg15[%c1, %c0_33, %c0_34] : memref<4x8x8xf32, #tpu.memory_space<vmem>>, vector<1x8x8xf32>
      %97 = vector.shape_cast %96 : vector<1x8x8xf32> to vector<8x8xf32>
      %c2 = arith.constant 2 : index
      %c0_35 = arith.constant 0 : index
      %c0_36 = arith.constant 0 : index
      %98 = vector.load %arg15[%c2, %c0_35, %c0_36] : memref<4x8x8xf32, #tpu.memory_space<vmem>>, vector<1x8x8xf32>
      %99 = vector.shape_cast %98 : vector<1x8x8xf32> to vector<8x8xf32>
      %c3 = arith.constant 3 : index
      %c0_37 = arith.constant 0 : index
      %c0_38 = arith.constant 0 : index
      %100 = vector.load %arg15[%c3, %c0_37, %c0_38] : memref<4x8x8xf32, #tpu.memory_space<vmem>>, vector<1x8x8xf32>
      %101 = vector.shape_cast %100 : vector<1x8x8xf32> to vector<8x8xf32>
      %102 = tpu.concatenate %95, %97, %99, %101 in 1 : vector<8x8xf32>, vector<8x8xf32>, vector<8x8xf32>, vector<8x8xf32> -> vector<8x32xf32>
      %103 = arith.truncf %102 : vector<8x32xf32> to vector<8x32xbf16>
      %c0_39 = arith.constant 0 : index
      %c0_40 = arith.constant 0 : index
      %104 = vector.load %arg10[%c0_39, %c0_40] : memref<32x32xbf16, #tpu.memory_space<vmem>>, vector<32x32xbf16>
      %cst_41 = arith.constant dense<0.000000e+00> : vector<8x32xf32>
      %105 = tpu.matmul %103, %104, %cst_41 {dimension_numbers = #tpu.dot_dimension_numbers<[1], [0], [0], [1], [0, 0, 1, 1], [], []>} : vector<8x32xbf16>, vector<32x32xbf16>, vector<8x32xf32> -> vector<8x32xf32>
      %c0_42 = arith.constant 0 : index
      %c0_43 = arith.constant 0 : index
      %c0_44 = arith.constant 0 : index
      %106 = vector.load %arg3[%c0_42, %c0_43, %c0_44] : memref<1x8x32xf32, #tpu.memory_space<vmem>>, vector<1x8x32xf32>
      %107 = vector.shape_cast %106 : vector<1x8x32xf32> to vector<8x32xf32>
      %108 = arith.addf %107, %105 : vector<8x32xf32>
      %c0_45 = arith.constant 0 : index
      %c0_46 = arith.constant 0 : index
      %c0_47 = arith.constant 0 : index
      %109 = vector.load %arg11[%c0_45, %c0_46, %c0_47] : memref<1x8x32xf32, #tpu.memory_space<vmem>>, vector<1x8x32xf32>
      %110 = vector.shape_cast %109 : vector<1x8x32xf32> to vector<8x32xf32>
      %111 = vector.shape_cast %108 : vector<8x32xf32> to vector<1x8x32xf32>
      tpu.vector_store %arg11[%c0_45, %c0_46, %c0_47], %111 {strides = array<i32>} : memref<1x8x32xf32, #tpu.memory_space<vmem>>, vector<1x8x32xf32>,
    } else {
    }
    return
  }
  func.func @transform_0(%arg0: i32, %arg1: i32, %arg2: memref<2xi32, #tpu.memory_space<smem>>) -> (i32, i32, i32) {
    %c0_i32 = arith.constant 0 : i32
    %c0_i32_0 = arith.constant 0 : i32
    %c0_i32_1 = arith.constant 0 : i32
    return %arg0, %c0_i32, %c0_i32_0 : i32, i32, i32
  }
  func.func @transform_1(%arg0: i32, %arg1: i32, %arg2: memref<2xi32, #tpu.memory_space<smem>>) -> (i32, i32) {
    %c0_i32 = arith.constant 0 : i32
    %c0_i32_0 = arith.constant 0 : i32
    %c0_i32_1 = arith.constant 0 : i32
    return %c0_i32, %c0_i32_0 : i32, i32
  }
  func.func @transform_2(%arg0: i32, %arg1: i32, %arg2: memref<2xi32, #tpu.memory_space<smem>>) -> (i32, i32) {
    %c0_i32 = arith.constant 0 : i32
    %c0_i32_0 = arith.constant 0 : i32
    %c0_i32_1 = arith.constant 0 : i32
    return %c0_i32, %c0_i32_0 : i32, i32
  }
  func.func @transform_3(%arg0: i32, %arg1: i32, %arg2: memref<2xi32, #tpu.memory_space<smem>>) -> (i32, i32) {
    %c0_i32 = arith.constant 0 : i32
    %c0_i32_0 = arith.constant 0 : i32
    %c0_i32_1 = arith.constant 0 : i32
    return %c0_i32, %c0_i32_0 : i32, i32
  }
  func.func @transform_4(%arg0: i32, %arg1: i32, %arg2: memref<2xi32, #tpu.memory_space<smem>>) -> (i32, i32, i32) {
    %c0_i32 = arith.constant 0 : i32
    %c0_i32_0 = arith.constant 0 : i32
    %c0_i32_1 = arith.constant 0 : i32
    return %arg1, %c0_i32, %c0_i32_0 : i32, i32, i32
  }
  func.func @transform_5(%arg0: i32, %arg1: i32, %arg2: memref<2xi32, #tpu.memory_space<smem>>) -> (i32, i32, i32) {
    %c0_i32 = arith.constant 0 : i32
    %c0_i32_0 = arith.constant 0 : i32
    %c0_i32_1 = arith.constant 0 : i32
    return %arg1, %c0_i32, %c0_i32_0 : i32, i32, i32
  }
  func.func @transform_6(%arg0: i32, %arg1: i32, %arg2: memref<2xi32, #tpu.memory_space<smem>>) -> (i32, i32, i32) {
    %c0_i32 = arith.constant 0 : i32
    %c0_i32_0 = arith.constant 0 : i32
    %c0_i32_1 = arith.constant 0 : i32
    return %arg1, %c0_i32, %c0_i32_0 : i32, i32, i32
  }
  func.func @transform_7(%arg0: i32, %arg1: i32, %arg2: memref<2xi32, #tpu.memory_space<smem>>) -> (i32, i32) {
    %c0_i32 = arith.constant 0 : i32
    %c0_i32_0 = arith.constant 0 : i32
    %c0_i32_1 = arith.constant 0 : i32
    return %c0_i32, %c0_i32_0 : i32, i32
  }
  func.func @transform_8(%arg0: i32, %arg1: i32, %arg2: memref<2xi32, #tpu.memory_space<smem>>) -> (i32, i32, i32) {
    %c0_i32 = arith.constant 0 : i32
    %c0_i32_0 = arith.constant 0 : i32
    %c0_i32_1 = arith.constant 0 : i32
    return %arg0, %c0_i32, %c0_i32_0 : i32, i32, i32
  }
}

</mosaic_0001>

<llo_original>
// kernel: tpu_custom_call.1
$region0: #{tpu_custom_call.1}
  #allocation0 [shape = 'u32[]', space=smem, size = 0x4, offset = 0x4, fixed_abs, tag = 'smem constant byte address 0x4 - core index']
  #allocation1 [shape = 'u32[72,128]{1,0:T(1,128)}', space=vmem, size = 0x9000, scoped, tag = 'internal scratch']
  #allocation2 [shape = 'f32[4,8,8]{2,1,0:T(8,128)}', space=vmem, size = 0x4000, scoped, tag = 'scratch operand']
  #allocation3 [shape = 'bf16[4,8,8]{2,1,0:T(8,128)(2,1)}', space=vmem, size = 0x2000, scoped, tag = 'scratch operand']
  #allocation4 [shape = 'bf16[4,8,8]{2,1,0:T(8,128)(2,1)}', space=vmem, size = 0x2000, scoped, tag = 'scratch operand']
  #allocation5 [shape = 'f32[4,8,8]{2,1,0:T(8,128)}', space=vmem, size = 0x4000, scoped, tag = 'scratch operand']
  #allocation6 [shape = 's32[1]{0}', space=sflag, size = 0x4, scoped, tag = 'scoped memory for tpu_custom_call.1']
  #allocation7 [shape = 'u8[512]{0}', space=smem, size = 0x200, scoped, tag = 'prefetched SMEM operand 0']
  %s0 = inlined_call_operand.hbm [shape: s32[2], index: 0, kind: input, shape index: {}]
  %s1 = inlined_call_operand.hbm [shape: f32[2,8,32], index: 1, kind: input, shape index: {}]
  %s2 = inlined_call_operand.hbm [shape: f32[1,32], index: 2, kind: input, shape index: {}]
  %s3 = inlined_call_operand.hbm [shape: f32[1,32], index: 3, kind: input, shape index: {}]
  %s4 = inlined_call_operand.hbm [shape: bf16[32,96], index: 4, kind: input, shape index: {}]
  %s5 = inlined_call_operand.vmem [shape: f32[4,1,8], index: 5, kind: input, shape index: {}]
  %s6 = inlined_call_operand.hbm [shape: f32[4,1,8], index: 6, kind: input, shape index: {}]
  %s7 = inlined_call_operand.hbm [shape: bf16[4,8,8], index: 7, kind: input, shape index: {}]
  %s8 = inlined_call_operand.hbm [shape: bf16[32,32], index: 8, kind: input, shape index: {}]
  %s9 = inlined_call_operand.hbm [shape: f32[2,8,32], index: 9, kind: output, shape index: {}]
  %s10 = sld [smem:[#allocation0]]
  $region101: #{tpu_custom_call.1} parent=0
    _
  %s12 = ssub.s32 1, %s10
  %s13 = scalar_select 0, %s12, %s10
  %s15 = sshll.u32 %s0, 4
  %s16 = int_to_ptr.hbm [resolvable:$true] %s15
  %18 = dma.hbm_to_smem %s16, 16, [#allocation7], [#allocation6]
  %20 = dma.done [#allocation6], 16
  %21 = sfence
  $region1: #{tpu_custom_call.1} parent=0
    #allocation8 [shape = 'u8[8192]{0}', space=vmem, size = 0x2000, scoped, tag = 'input window, operand 1']
    #allocation9 [shape = 's32[2]{0}', space=sflag, size = 0x8, scoped, tag = 'scoped memory for tpu_custom_call.1']
    #allocation10 [shape = 's32[2]{0}', space=sflag, size = 0x8, scoped, tag = 'scoped memory for tpu_custom_call.1']
    #allocation11 [shape = 'u8[512]{0}', space=vmem, size = 0x400, scoped, tag = 'input window, operand 2, single buffered']
    #allocation12 [shape = 's32[1]{0}', space=sflag, size = 0x4, scoped, tag = 'scoped memory for tpu_custom_call.1']
    #allocation13 [shape = 'u8[512]{0}', space=vmem, size = 0x400, scoped, tag = 'input window, operand 3, single buffered']
    #allocation14 [shape = 'u8[8192]{0}', space=vmem, size = 0x2000, scoped, tag = 'input window, operand 4, single buffered']
    #allocation15 [shape = 's32[1]{0}', space=sflag, size = 0x4, scoped, tag = 'scoped memory for tpu_custom_call.1']
    #allocation16 [shape = 'u8[1024]{0}', space=vmem, size = 0x400, scoped, tag = 'input window, operand 6']
    #allocation17 [shape = 'u8[4096]{0}', space=vmem, size = 0x1000, scoped, tag = 'input window, operand 7']
    #allocation18 [shape = 'u8[8192]{0}', space=vmem, size = 0x2000, scoped, tag = 'input window, operand 8, single buffered']
    #allocation19 [shape = 'u8[8192]{0}', space=vmem, size = 0x2000, scoped, tag = 'output window, operand 0']
    %22 = vsyncpa [#allocation9], 0
    %s23 = scalar_lea.sflag [#allocation9], 1
    %24 = vsyncpa %s23, 0
    %25 = vsyncpa [#allocation12], 0
    %26 = vsyncpa [#allocation15], 0
    %27 = vsyncpa [#allocation10], 0
    %s28 = scalar_lea.sflag [#allocation10], 1
    %29 = vsyncpa %s28, 0
    loop: start=0, step=1, limit=10
    $region2: #{tpu_custom_call.1} parent=1 // loop_pre_header
      _
    $region3: #{tpu_custom_call.1} parent=1 // loop_header
      %s31 = sphi 0, %s35
      %p32 = scmp.ge.s32.totalorder %s31, 10
      %s38 = sphi 0, %s50
      %s39 = sphi 0, %s46
      %s40 = sphi 0, %s38
      %s41 = sphi 0, %s39
      %s42 = sphi 0, %s40
      %s43 = sphi 0, %s41
      %s53 = sphi 0, %s55
      %s56 = sphi 0, %s53
      %s57 = sphi 0, %s56
      %s73 = sphi 0, %s57
      %s77 = sphi 0, %s77
      %s79 = sphi 0, %s77
      %s80 = sphi 0, %s79
      %s94 = sphi 0, %s80
      %s98 = sphi 0, %s98
      %s100 = sphi 0, %s98
      %s101 = sphi 0, %s100
      %s115 = sphi 0, %s101
      %s119 = sphi 0, %s119
      %s121 = sphi 0, %s119
      %s122 = sphi 0, %s121
      %s136 = sphi 0, %s122
      %s142 = sphi 0, %s144
      %s145 = sphi 0, %s142
      %s146 = sphi 0, %s145
      %s162 = sphi 0, %s146
      %s168 = sphi 0, %s170
      %s171 = sphi 0, %s168
      %s172 = sphi 0, %s171
      %s188 = sphi 0, %s172
      %s194 = sphi 0, %s196
      %s197 = sphi 0, %s194
      %s198 = sphi 0, %s197
      %s214 = sphi 0, %s198
      %s218 = sphi 0, %s218
      %s220 = sphi 0, %s218
      %s221 = sphi 0, %s220
      %s235 = sphi 0, %s221
      %s241 = sphi 0, %s243
      %s244 = sphi 0, %s241
      %s245 = sphi 0, %s244
      %s261 = sphi 0, %s245
    $region4: #{tpu_custom_call.1} parent=1 // loop_header_branch
      %34 = sbr.rel (%p32) target = $region8
    $region5: #{tpu_custom_call.1} parent=1 // loop_body
      %s36 = ssub.s32 %s31, 1
      %s37 = ssub.s32 %s31, 2
      %s44 = sadd.s32 1, %s39
      %p45 = scmp.ge.s32.totalorder %s44, 4
      %s46 = scalar_select %p45, 0, %s44
      %s47 = sadd.s32 1, %s38
      %s48 = scalar_select %p45, %s47, %s38
      %p49 = scmp.ge.s32.totalorder %s48, 2
      %s50 = scalar_select %p49, 0, %s48
      %s51 = ssub.s32 %s38, %s50
      %p52 = scmp.eq.s32.totalorder %s51, 0
      %s54 = sadd.s32 %s53, 1
      %s55 = scalar_select %p52, %s53, %s54
      %p58 = pneg %p52
      %p59 = scmp.eq.s32.totalorder %s31, 7
      %p60 = por %p58, %p59
      %p61 = scmp.ne.s32.totalorder %s53, %s56
      %p62 = scmp.eq.s32.totalorder %s31, 0
      %p63 = por %p61, %p62
      %p64 = scmp.ne.s32.totalorder %s53, %s56
      %p65 = scmp.eq.s32.totalorder %s36, 7
      %p66 = por %p64, %p65
      %p67 = scmp.ne.s32.totalorder %s56, %s57
      %p68 = scmp.eq.s32.totalorder %s36, 0
      %p69 = por %p67, %p68
      %p70 = scmp.ne.s32.totalorder %s56, %s57
      %p71 = scmp.eq.s32.totalorder %s37, 7
      %p72 = por %p70, %p71
      %p74 = scmp.ne.s32.totalorder %s57, %s73
      %p75 = scmp.eq.s32.totalorder %s37, 0
      %p76 = por %p74, %p75
      %s78 = sadd.s32 %s77, 1
      %p81 = scmp.eq.s32.totalorder %s31, 7
      %p82 = scmp.ne.s32.totalorder %s77, %s79
      %p83 = scmp.eq.s32.totalorder %s31, 0
      %p84 = por %p82, %p83
      %p85 = scmp.ne.s32.totalorder %s77, %s79
      %p86 = scmp.eq.s32.totalorder %s36, 7
      %p87 = por %p85, %p86
      %p88 = scmp.ne.s32.totalorder %s79, %s80
      %p89 = scmp.eq.s32.totalorder %s36, 0
      %p90 = por %p88, %p89
      %p91 = scmp.ne.s32.totalorder %s79, %s80
      %p92 = scmp.eq.s32.totalorder %s37, 7
      %p93 = por %p91, %p92
      %p95 = scmp.ne.s32.totalorder %s80, %s94
      %p96 = scmp.eq.s32.totalorder %s37, 0
      %p97 = por %p95, %p96
      %s99 = sadd.s32 %s98, 1
      %p102 = scmp.eq.s32.totalorder %s31, 7
      %p103 = scmp.ne.s32.totalorder %s98, %s100
      %p104 = scmp.eq.s32.totalorder %s31, 0
      %p105 = por %p103, %p104
      %p106 = scmp.ne.s32.totalorder %s98, %s100
      %p107 = scmp.eq.s32.totalorder %s36, 7
      %p108 = por %p106, %p107
      %p109 = scmp.ne.s32.totalorder %s100, %s101
      %p110 = scmp.eq.s32.totalorder %s36, 0
      %p111 = por %p109, %p110
      %p112 = scmp.ne.s32.totalorder %s100, %s101
      %p113 = scmp.eq.s32.totalorder %s37, 7
      %p114 = por %p112, %p113
      %p116 = scmp.ne.s32.totalorder %s101, %s115
      %p117 = scmp.eq.s32.totalorder %s37, 0
      %p118 = por %p116, %p117
      %s120 = sadd.s32 %s119, 1
      %p123 = scmp.eq.s32.totalorder %s31, 7
      %p124 = scmp.ne.s32.totalorder %s119, %s121
      %p125 = scmp.eq.s32.totalorder %s31, 0
      %p126 = por %p124, %p125
      %p127 = scmp.ne.s32.totalorder %s119, %s121
      %p128 = scmp.eq.s32.totalorder %s36, 7
      %p129 = por %p127, %p128
      %p130 = scmp.ne.s32.totalorder %s121, %s122
      %p131 = scmp.eq.s32.totalorder %s36, 0
      %p132 = por %p130, %p131
      %p133 = scmp.ne.s32.totalorder %s121, %s122
      %p134 = scmp.eq.s32.totalorder %s37, 7
      %p135 = por %p133, %p134
      %p137 = scmp.ne.s32.totalorder %s122, %s136
      %p138 = scmp.eq.s32.totalorder %s37, 0
      %p139 = por %p137, %p138
      %s140 = ssub.s32 %s39, %s46
      %p141 = scmp.eq.s32.totalorder %s140, 0
      %s143 = sadd.s32 %s142, 1
      %s144 = scalar_select %p141, %s142, %s143
      %p147 = pneg %p141
      %p148 = scmp.eq.s32.totalorder %s31, 7
      %p149 = por %p147, %p148
      %p150 = scmp.ne.s32.totalorder %s142, %s145
      %p151 = scmp.eq.s32.totalorder %s31, 0
      %p152 = por %p150, %p151
      %p153 = scmp.ne.s32.totalorder %s142, %s145
      %p154 = scmp.eq.s32.totalorder %s36, 7
      %p155 = por %p153, %p154
      %p156 = scmp.ne.s32.totalorder %s145, %s146
      %p157 = scmp.eq.s32.totalorder %s36, 0
      %p158 = por %p156, %p157
      %p159 = scmp.ne.s32.totalorder %s145, %s146
      %p160 = scmp.eq.s32.totalorder %s37, 7
      %p161 = por %p159, %p160
      %p163 = scmp.ne.s32.totalorder %s146, %s162
      %p164 = scmp.eq.s32.totalorder %s37, 0
      %p165 = por %p163, %p164
      %s166 = ssub.s32 %s39, %s46
      %p167 = scmp.eq.s32.totalorder %s166, 0
      %s169 = sadd.s32 %s168, 1
      %s170 = scalar_select %p167, %s168, %s169
      %p173 = pneg %p167
      %p174 = scmp.eq.s32.totalorder %s31, 7
      %p175 = por %p173, %p174
      %p176 = scmp.ne.s32.totalorder %s168, %s171
      %p177 = scmp.eq.s32.totalorder %s31, 0
      %p178 = por %p176, %p177
      %p179 = scmp.ne.s32.totalorder %s168, %s171
      %p180 = scmp.eq.s32.totalorder %s36, 7
      %p181 = por %p179, %p180
      %p182 = scmp.ne.s32.totalorder %s171, %s172
      %p183 = scmp.eq.s32.totalorder %s36, 0
      %p184 = por %p182, %p183
      %p185 = scmp.ne.s32.totalorder %s171, %s172
      %p186 = scmp.eq.s32.totalorder %s37, 7
      %p187 = por %p185, %p186
      %p189 = scmp.ne.s32.totalorder %s172, %s188
      %p190 = scmp.eq.s32.totalorder %s37, 0
      %p191 = por %p189, %p190
      %s192 = ssub.s32 %s39, %s46
      %p193 = scmp.eq.s32.totalorder %s192, 0
      %s195 = sadd.s32 %s194, 1
      %s196 = scalar_select %p193, %s194, %s195
      %p199 = pneg %p193
      %p200 = scmp.eq.s32.totalorder %s31, 7
      %p201 = por %p199, %p200
      %p202 = scmp.ne.s32.totalorder %s194, %s197
      %p203 = scmp.eq.s32.totalorder %s31, 0
      %p204 = por %p202, %p203
      %p205 = scmp.ne.s32.totalorder %s194, %s197
      %p206 = scmp.eq.s32.totalorder %s36, 7
      %p207 = por %p205, %p206
      %p208 = scmp.ne.s32.totalorder %s197, %s198
      %p209 = scmp.eq.s32.totalorder %s36, 0
      %p210 = por %p208, %p209
      %p211 = scmp.ne.s32.totalorder %s197, %s198
      %p212 = scmp.eq.s32.totalorder %s37, 7
      %p213 = por %p211, %p212
      %p215 = scmp.ne.s32.totalorder %s198, %s214
      %p216 = scmp.eq.s32.totalorder %s37, 0
      %p217 = por %p215, %p216
      %s219 = sadd.s32 %s218, 1
      %p222 = scmp.eq.s32.totalorder %s31, 7
      %p223 = scmp.ne.s32.totalorder %s218, %s220
      %p224 = scmp.eq.s32.totalorder %s31, 0
      %p225 = por %p223, %p224
      %p226 = scmp.ne.s32.totalorder %s218, %s220
      %p227 = scmp.eq.s32.totalorder %s36, 7
      %p228 = por %p226, %p227
      %p229 = scmp.ne.s32.totalorder %s220, %s221
      %p230 = scmp.eq.s32.totalorder %s36, 0
      %p231 = por %p229, %p230
      %p232 = scmp.ne.s32.totalorder %s220, %s221
      %p233 = scmp.eq.s32.totalorder %s37, 7
      %p234 = por %p232, %p233
      %p236 = scmp.ne.s32.totalorder %s221, %s235
      %p237 = scmp.eq.s32.totalorder %s37, 0
      %p238 = por %p236, %p237
      %s239 = ssub.s32 %s38, %s50
      %p240 = scmp.eq.s32.totalorder %s239, 0
      %s242 = sadd.s32 %s241, 1
      %s243 = scalar_select %p240, %s241, %s242
      %p246 = pneg %p240
      %p247 = scmp.eq.s32.totalorder %s31, 7
      %p248 = por %p246, %p247
      %p249 = scmp.ne.s32.totalorder %s241, %s244
      %p250 = scmp.eq.s32.totalorder %s31, 0
      %p251 = por %p249, %p250
      %p252 = scmp.ne.s32.totalorder %s241, %s244
      %p253 = scmp.eq.s32.totalorder %s36, 7
      %p254 = por %p252, %p253
      %p255 = scmp.ne.s32.totalorder %s244, %s245
      %p256 = scmp.eq.s32.totalorder %s36, 0
      %p257 = por %p255, %p256
      %p258 = scmp.ne.s32.totalorder %s244, %s245
      %p259 = scmp.eq.s32.totalorder %s37, 7
      %p260 = por %p258, %p259
      %p262 = scmp.ne.s32.totalorder %s245, %s261
      %p263 = scmp.eq.s32.totalorder %s37, 0
      %p264 = por %p262, %p263
      %p265 = scmp.le.s32.totalorder 1, %s31
      %p266 = scmp.lt.s32.totalorder %s31, 9
      %p267 = pnand %p265, %p266
      %p268 = pneg %p267
      // Predicated region
      $region9: #{tpu_custom_call.1} parent=5 // pred_check
        _
      $region10: #{tpu_custom_call.1} parent=5 // pred_check_branch
        %270 = sbr.rel (%p267) target = $region12
      $region11: #{tpu_custom_call.1} parent=5 // pred_region
        %s271 = ssub.s32 %s31, 1
        // Predicated region
        $region13: #{tpu_custom_call.1} parent=11 // pred_check
          %p272 = pneg %p90
        $region14: #{tpu_custom_call.1} parent=11 // pred_check_branch
          %274 = sbr.rel (%p272) target = $region16
        $region15: #{tpu_custom_call.1} parent=11 // pred_region
          %276 = vsyncadd [#allocation12], 0
          %s278 = sshll.u32 %s2, 4
          %s279 = int_to_ptr.hbm [resolvable:$true] %s278
          %s280 = sshll.u32 [#allocation11], 4
          %s281 = int_to_ptr.vmem [resolvable:$true] %s280
          %283 = dma.hbm_to_vmem [thread:$0]  %s279, 16, %s281, [#allocation12]
        $region16: #{tpu_custom_call.1} parent=11 // pred_fallthru
          _
        // Predicated region
        $region17: #{tpu_custom_call.1} parent=11 // pred_check
          %p284 = pneg %p111
        $region18: #{tpu_custom_call.1} parent=11 // pred_check_branch
          %286 = sbr.rel (%p284) target = $region20
        $region19: #{tpu_custom_call.1} parent=11 // pred_region
          %288 = vsyncadd [#allocation12], 0
          %s290 = sshll.u32 %s3, 4
          %s291 = int_to_ptr.hbm [resolvable:$true] %s290
          %s292 = sshll.u32 [#allocation13], 4
          %s293 = int_to_ptr.vmem [resolvable:$true] %s292
          %295 = dma.hbm_to_vmem [thread:$0]  %s291, 16, %s293, [#allocation12]
        $region20: #{tpu_custom_call.1} parent=11 // pred_fallthru
          _
        // Predicated region
        $region21: #{tpu_custom_call.1} parent=11 // pred_check
          %p296 = pneg %p132
        $region22: #{tpu_custom_call.1} parent=11 // pred_check_branch
          %298 = sbr.rel (%p296) target = $region24
        $region23: #{tpu_custom_call.1} parent=11 // pred_region
          %300 = vsyncadd [#allocation15], 0
          %s301 = sshll.u32 %s4, 4
          %s302 = int_to_ptr.hbm [resolvable:$true] %s301
          %s303 = sshll.u32 [#allocation14], 4
          %s304 = int_to_ptr.vmem [resolvable:$true] %s303
          %309 = dma.hbm_to_vmem [thread:$0]  %s302, 256, %s304, [#allocation15], 64, 64, 4
        $region24: #{tpu_custom_call.1} parent=11 // pred_fallthru
          _
        // Predicated region
        $region25: #{tpu_custom_call.1} parent=11 // pred_check
          %p310 = pneg %p231
        $region26: #{tpu_custom_call.1} parent=11 // pred_check_branch
          %312 = sbr.rel (%p310) target = $region28
        $region27: #{tpu_custom_call.1} parent=11 // pred_region
          %314 = vsyncadd [#allocation12], 0
          %s315 = sshll.u32 %s8, 4
          %s316 = int_to_ptr.hbm [resolvable:$true] %s315
          %s317 = sshll.u32 [#allocation18], 4
          %s318 = int_to_ptr.vmem [resolvable:$true] %s317
          %323 = dma.hbm_to_vmem [thread:$0]  %s316, 256, %s318, [#allocation12], 64, 64, 4
        $region28: #{tpu_custom_call.1} parent=11 // pred_fallthru
          _
      $region12: #{tpu_custom_call.1} parent=5 // pred_fallthru
        _
      %p324 = scmp.lt.s32.totalorder %s31, 8
      // Predicated region
      $region29: #{tpu_custom_call.1} parent=5 // pred_check
        %p325 = pneg %p324
      $region30: #{tpu_custom_call.1} parent=5 // pred_check_branch
        %327 = sbr.rel (%p325) target = $region32
      $region31: #{tpu_custom_call.1} parent=5 // pred_region
        // Predicated region
        $region33: #{tpu_custom_call.1} parent=31 // pred_check
          %p328 = pneg %p63
        $region34: #{tpu_custom_call.1} parent=31 // pred_check_branch
          %330 = sbr.rel (%p328) target = $region36
        $region35: #{tpu_custom_call.1} parent=31 // pred_region
          %s331 = sand.u32 %s31, 1
          %s332 = scalar_lea.sflag [#allocation9], %s331
          %s333 = sand.u32 %s53, 1
          %s334 = smul.addr %s333, 8
          %s335 = scalar_lea.vmem [#allocation8], %s334
          %337 = vsyncadd %s332, 0
          %s338 = smul.addr %s38, 8
          %s339 = scalar_lea.hbm %s1, %s338
          %s341 = sshll.u32 %s339, 4
          %s342 = int_to_ptr.hbm [resolvable:$true] %s341
          %s343 = sshll.u32 %s335, 4
          %s344 = int_to_ptr.vmem [resolvable:$true] %s343
          %346 = dma.hbm_to_vmem [thread:$0]  %s342, 128, %s344, %s332
        $region36: #{tpu_custom_call.1} parent=31 // pred_fallthru
          _
        // Predicated region
        $region37: #{tpu_custom_call.1} parent=31 // pred_check
          %p347 = pneg %p152
        $region38: #{tpu_custom_call.1} parent=31 // pred_check_branch
          %349 = sbr.rel (%p347) target = $region40
        $region39: #{tpu_custom_call.1} parent=31 // pred_region
          %p350 = scmp.lt.s32.totalorder %s39, 3
          %s351 = scalar_select %p350, %s39, 3
          %s352 = scalar_lea.vmem %s5, %s351
        $region40: #{tpu_custom_call.1} parent=31 // pred_fallthru
          _
        // Predicated region
        $region41: #{tpu_custom_call.1} parent=31 // pred_check
          %p353 = pneg %p178
        $region42: #{tpu_custom_call.1} parent=31 // pred_check_branch
          %355 = sbr.rel (%p353) target = $region44
        $region43: #{tpu_custom_call.1} parent=31 // pred_region
          %s356 = sand.u32 %s31, 1
          %s357 = scalar_lea.sflag [#allocation9], %s356
          %s358 = sand.u32 %s168, 1
          %s359 = scalar_lea.vmem [#allocation16], %s358
          %361 = vsyncadd %s357, 0
          %s362 = scalar_lea.hbm %s6, %s39
          %s364 = sshll.u32 %s362, 4
          %s365 = int_to_ptr.hbm [resolvable:$true] %s364
          %s366 = sshll.u32 %s359, 4
          %s367 = int_to_ptr.vmem [resolvable:$true] %s366
          %369 = dma.hbm_to_vmem [thread:$0]  %s365, 16, %s367, %s357
        $region44: #{tpu_custom_call.1} parent=31 // pred_fallthru
          _
        // Predicated region
        $region45: #{tpu_custom_call.1} parent=31 // pred_check
          %p370 = pneg %p204
        $region46: #{tpu_custom_call.1} parent=31 // pred_check_branch
          %372 = sbr.rel (%p370) target = $region48
        $region47: #{tpu_custom_call.1} parent=31 // pred_region
          %s373 = sand.u32 %s31, 1
          %s374 = scalar_lea.sflag [#allocation9], %s373
          %s375 = sand.u32 %s194, 1
          %s376 = smul.addr %s375, 4
          %s377 = scalar_lea.vmem [#allocation17], %s376
          %379 = vsyncadd %s374, 0
          %s380 = smul.addr %s39, 4
          %s381 = scalar_lea.hbm %s7, %s380
          %s383 = sshll.u32 %s381, 4
          %s384 = int_to_ptr.hbm [resolvable:$true] %s383
          %s385 = sshll.u32 %s377, 4
          %s386 = int_to_ptr.vmem [resolvable:$true] %s385
          %388 = dma.hbm_to_vmem [thread:$0]  %s384, 64, %s386, %s374
        $region48: #{tpu_custom_call.1} parent=31 // pred_fallthru
          _
      $region32: #{tpu_custom_call.1} parent=5 // pred_fallthru
        _
      %p389 = scmp.le.s32.totalorder 1, %s31
      %p390 = scmp.lt.s32.totalorder %s31, 9
      %p391 = pnand %p389, %p390
      %p392 = pneg %p391
      // Predicated region
      $region49: #{tpu_custom_call.1} parent=5 // pred_check
        _
      $region50: #{tpu_custom_call.1} parent=5 // pred_check_branch
        %394 = sbr.rel (%p391) target = $region52
      $region51: #{tpu_custom_call.1} parent=5 // pred_region
        %s395 = ssub.s32 %s31, 1
        %s396 = sand.u32 %s36, 1
        %s397 = scalar_lea.sflag [#allocation9], %s396
        %s398 = sand.u32 %s56, 1
        %s399 = smul.addr %s398, 8
        %s400 = scalar_lea.vmem [#allocation8], %s399
        // Predicated region
        $region53: #{tpu_custom_call.1} parent=51 // pred_check
          %p401 = pneg %p69
        $region54: #{tpu_custom_call.1} parent=51 // pred_check_branch
          %403 = sbr.rel (%p401) target = $region56
        $region55: #{tpu_custom_call.1} parent=51 // pred_region
          %405 = dma.done %s397, 128
        $region56: #{tpu_custom_call.1} parent=51 // pred_fallthru
          _
        // Predicated region
        $region57: #{tpu_custom_call.1} parent=51 // pred_check
          %p406 = pneg %p90
        $region58: #{tpu_custom_call.1} parent=51 // pred_check_branch
          %408 = sbr.rel (%p406) target = $region60
        $region59: #{tpu_custom_call.1} parent=51 // pred_region
          %410 = dma.done [#allocation12], 16
        $region60: #{tpu_custom_call.1} parent=51 // pred_fallthru
          _
        // Predicated region
        $region61: #{tpu_custom_call.1} parent=51 // pred_check
          %p411 = pneg %p111
        $region62: #{tpu_custom_call.1} parent=51 // pred_check_branch
          %413 = sbr.rel (%p411) target = $region64
        $region63: #{tpu_custom_call.1} parent=51 // pred_region
          %415 = dma.done [#allocation12], 16
        $region64: #{tpu_custom_call.1} parent=51 // pred_fallthru
          _
        // Predicated region
        $region65: #{tpu_custom_call.1} parent=51 // pred_check
          %p416 = pneg %p132
        $region66: #{tpu_custom_call.1} parent=51 // pred_check_branch
          %418 = sbr.rel (%p416) target = $region68
        $region67: #{tpu_custom_call.1} parent=51 // pred_region
          %420 = dma.done [#allocation15], 256
        $region68: #{tpu_custom_call.1} parent=51 // pred_fallthru
          _
        %s421 = sand.u32 %s36, 1
        %s422 = scalar_lea.sflag [#allocation9], %s421
        %s423 = sand.u32 %s171, 1
        %s424 = scalar_lea.vmem [#allocation16], %s423
        // Predicated region
        $region69: #{tpu_custom_call.1} parent=51 // pred_check
          %p425 = pneg %p184
        $region70: #{tpu_custom_call.1} parent=51 // pred_check_branch
          %427 = sbr.rel (%p425) target = $region72
        $region71: #{tpu_custom_call.1} parent=51 // pred_region
          %429 = dma.done %s422, 16
        $region72: #{tpu_custom_call.1} parent=51 // pred_fallthru
          _
        %s430 = sand.u32 %s36, 1
        %s431 = scalar_lea.sflag [#allocation9], %s430
        %s432 = sand.u32 %s197, 1
        %s433 = smul.addr %s432, 4
        %s434 = scalar_lea.vmem [#allocation17], %s433
        // Predicated region
        $region73: #{tpu_custom_call.1} parent=51 // pred_check
          %p435 = pneg %p210
        $region74: #{tpu_custom_call.1} parent=51 // pred_check_branch
          %437 = sbr.rel (%p435) target = $region76
        $region75: #{tpu_custom_call.1} parent=51 // pred_region
          %439 = dma.done %s431, 64
        $region76: #{tpu_custom_call.1} parent=51 // pred_fallthru
          _
        // Predicated region
        $region77: #{tpu_custom_call.1} parent=51 // pred_check
          %p440 = pneg %p231
        $region78: #{tpu_custom_call.1} parent=51 // pred_check_branch
          %442 = sbr.rel (%p440) target = $region80
        $region79: #{tpu_custom_call.1} parent=51 // pred_region
          %444 = dma.done [#allocation12], 256
        $region80: #{tpu_custom_call.1} parent=51 // pred_fallthru
          _
        %s445 = sand.u32 %s36, 1
        %s446 = scalar_lea.sflag [#allocation9], %s445
        %s447 = sand.u32 %s56, 1
        %s448 = smul.addr %s447, 8
        %s449 = scalar_lea.vmem [#allocation8], %s448
        %p450 = pneg %p69
        %p451 = pneg %p66
        %p452 = pneg %p90
        %p453 = pneg %p87
        %p454 = pneg %p111
        %p455 = pneg %p108
        %p456 = pneg %p132
        %p457 = pneg %p129
        %p458 = scmp.lt.s32.totalorder %s41, 3
        %s459 = scalar_select %p458, %s41, 3
        %s460 = scalar_lea.vmem %s5, %s459
        %p461 = pneg %p158
        %p462 = pneg %p155
        %s463 = sand.u32 %s36, 1
        %s464 = scalar_lea.sflag [#allocation9], %s463
        %s465 = sand.u32 %s171, 1
        %s466 = scalar_lea.vmem [#allocation16], %s465
        %p467 = pneg %p184
        %p468 = pneg %p181
        %s469 = sand.u32 %s36, 1
        %s470 = scalar_lea.sflag [#allocation9], %s469
        %s471 = sand.u32 %s197, 1
        %s472 = smul.addr %s471, 4
        %s473 = scalar_lea.vmem [#allocation17], %s472
        %p474 = pneg %p210
        %p475 = pneg %p207
        %p476 = pneg %p231
        %p477 = pneg %p228
        %p478 = pneg %p257
        %p479 = pneg %p254
        %s480 = sand.u32 %s244, 1
        %s481 = scalar_lea.sflag [#allocation10], %s480
        %s482 = sand.u32 %s244, 1
        %s483 = smul.addr %s482, 8
        %s484 = scalar_lea.vmem [#allocation19], %s483
        %p485 = scmp.lt.s32.totalorder %s41, 3
        %s486 = scalar_select %p485, %s41, 3
        %s487 = scalar_lea.vmem %s5, %s486
        %p489 = scmp.eq.s32.totalorder %s41, 0
        // Predicated region
        $region81: #{tpu_custom_call.1} parent=51 // pred_check
          %p490 = pneg %p489
        $region82: #{tpu_custom_call.1} parent=51 // pred_check_branch
          %492 = sbr.rel (%p490) target = $region84
        $region83: #{tpu_custom_call.1} parent=51 // pred_region
          %v493 = vld [vmem:[%s400] sm:$0xff]
          %vm494 = vcmask 261120
          %v495 = vsel %vm494, %v493, 0.0
          %496 = vadd.xlane.f32.xlu0 %v495
          %v497 = vpop.xlane.xlu0 %496
          %v498 = vrcp.pop 32.0
          %v499 = vmul.f32 32.0, %v498
          %v500 = vsub.f32 1.0, %v499
          %v501 = vmul.f32 %v498, %v500
          %v502 = vadd.f32 %v498, %v501
          %vm503 = vweird.f32 %v498
          %v504 = vsel %vm503, %v498, %v502
          %v505 = vmul.f32 %v497, %v504
          %v506 = vsub.f32 %v493, %v505
          %v507 = vmul.f32 %v506, %v506
          %v508 = vsel %vm494, %v507, 0.0
          %509 = vadd.xlane.f32.xlu0 %v508
          %v510 = vpop.xlane.xlu0 %509
          %v511 = vmul.f32 %v510, %v504
          %v512 = vadd.f32 %v511, 1e-05
          %v513 = vrsqrt.pop %v512
          %v514 = vmul.f32 %v513, %v512
          %v515 = vmul.f32 %v514, %v513
          %v516 = vmul.f32 0.5, %v515
          %v517 = vsub.f32 1.5, %v516
          %v518 = vmul.f32 %v513, %v517
          %vm519 = vweird.f32 %v512
          %vm520 = vweird.f32 %v513
          %vm521 = vmor %vm519, %vm520
          %v522 = vsel %vm521, %v513, %v518
          %v523 = vmul.f32 %v506, %v522
          %v524 = vld [vmem:[#allocation11] sm:$0x1]
          %v526 = vperm.slane %v524, 0
          %v528 = vmul.f32 %v523, %v526
          %v529 = vld [vmem:[#allocation13] sm:$0x1]
          %v531 = vperm.slane %v529, 0
          %v533 = vadd.f32 %v528, %v531
          %v534 = vpack.c.bf16 %v533, %v533
          %v535 = vld [vmem:[#allocation14] sm:$0xf]
          %v536 = vld [vmem:[#allocation14 + $0x4] sm:$0xf]
          %v537 = vld [vmem:[#allocation14 + $0x8] sm:$0xf]
          %v538 = vld [vmem:[#allocation14 + $0xc] sm:$0xf]
          %v543 = vunpack.c.l.b16 %v535
          %v544 = vunpack.c.l.b16 %v536
          %v545 = vunpack.c.l.b16 %v537
          %v546 = vunpack.c.l.b16 %v538
          %v547 = vpack.c.b16 %v544, %v543
          %v548 = vpack.c.b16 %v546, %v545
          %v552 = vsel %vm494, %v534, 0
          %554 = vmatpush.bf16.msra.mxu0 0
          %555 = vmatpush.bf16.msra.mxu0 0
          %556 = vmatpush.bf16.msra.mxu0 0
          %557 = vmatpush.bf16.msra.mxu0 0
          %558 = vmatpush.bf16.msra.mxu0 0
          %559 = vmatpush.bf16.msra.mxu0 0
          %560 = vmatpush.bf16.msra.mxu0 %v548
          %561 = vmatpush.bf16.msra.mxu0 %v547
          %562 = vmatmul.bf16.gmra.mxu0 %v552
          %v563 = vpop.f32.mrf.mxu0
          %v564 = vadd.f32 0.0, %v563
          %v565 = vpop.f32.mrf.mxu0
          %566 = vdwg.mxu0
          %v567 = vmul.f32 %v564, 0.35355338
          %vm568 = vcmask 64512
          %569 = vst.msk [vmem:[#allocation2] sm:$0xff] %vm568, %v567
          %v570 = vpack.c.bf16 %v564, %v564
          %572 = vrot.lane.b32.xlu0 %v570, 96
          %v573 = vpop.permute.xlu0 %572
          %vm575 = vcmask 60416
          %576 = vst.msk [vmem:[#allocation3] sm:$0xf] %vm575, %v573
          %577 = vrot.lane.b32.xlu0 %v570, 64
          %v578 = vpop.permute.xlu0 %577
          %580 = vst.msk [vmem:[#allocation4] sm:$0xf] %vm575, %v578
          %582 = vrot.lane.b32.xlu0 %v567, 120
          %v583 = vpop.permute.xlu0 %582
          %s585 = scalar_lea.vmem [#allocation2], 8
          %586 = vst.msk [vmem:[%s585] sm:$0xff] %vm568, %v583
          %587 = vrot.lane.b32.xlu0 %v570, 88
          %v588 = vpop.permute.xlu0 %587
          %s590 = scalar_lea.vmem [#allocation3], 4
          %591 = vst.msk [vmem:[%s590] sm:$0xf] %vm575, %v588
          %592 = vrot.lane.b32.xlu0 %v570, 56
          %v593 = vpop.permute.xlu0 %592
          %s595 = scalar_lea.vmem [#allocation4], 4
          %596 = vst.msk [vmem:[%s595] sm:$0xf] %vm575, %v593
          %597 = vrot.lane.b32.xlu0 %v567, 112
          %v598 = vpop.permute.xlu0 %597
          %s600 = scalar_lea.vmem [#allocation2], 16
          %601 = vst.msk [vmem:[%s600] sm:$0xff] %vm568, %v598
          %602 = vrot.lane.b32.xlu0 %v570, 80
          %v603 = vpop.permute.xlu0 %602
          %s605 = scalar_lea.vmem [#allocation3], 8
          %606 = vst.msk [vmem:[%s605] sm:$0xf] %vm575, %v603
          %607 = vrot.lane.b32.xlu0 %v570, 48
          %v608 = vpop.permute.xlu0 %607
          %s610 = scalar_lea.vmem [#allocation4], 8
          %611 = vst.msk [vmem:[%s610] sm:$0xf] %vm575, %v608
          %612 = vrot.lane.b32.xlu0 %v567, 104
          %v613 = vpop.permute.xlu0 %612
          %s615 = scalar_lea.vmem [#allocation2], 24
          %616 = vst.msk [vmem:[%s615] sm:$0xff] %vm568, %v613
          %617 = vrot.lane.b32.xlu0 %v570, 72
          %v618 = vpop.permute.xlu0 %617
          %s620 = scalar_lea.vmem [#allocation3], 12
          %621 = vst.msk [vmem:[%s620] sm:$0xf] %vm575, %v618
          %622 = vrot.lane.b32.xlu0 %v570, 40
          %v623 = vpop.permute.xlu0 %622
          %s625 = scalar_lea.vmem [#allocation4], 12
          %626 = vst.msk [vmem:[%s625] sm:$0xf] %vm575, %v623
        $region84: #{tpu_custom_call.1} parent=51 // pred_fallthru
          _
        %s627 = smul.u32 %s41, 8
        %s628 = scalar_lea.vmem [#allocation2], %s627
        %v629 = vld [vmem:[%s628] sm:$0xff]
        %v630 = vld [vmem:[%s487] sm:$0x1]
        %v632 = vperm.slane %v630, 0
        %v634 = vadd.f32 %v629, %v632
        %v635 = vpack.c.bf16 %v634, %v634
        %v636 = vld [vmem:[%s424] sm:$0x1]
        %v638 = vperm.slane %v636, 0
        %v640 = vadd.f32 %v629, %v638
        %v641 = vpack.c.bf16 %v640, %v640
        %s642 = smul.addr %s41, 4
        %s643 = scalar_lea.vmem [#allocation3], %s642
        %v644 = vld [vmem:[%s643] sm:$0xf]
        %s645 = smul.addr %s41, 4
        %s646 = scalar_lea.vmem [#allocation4], %s645
        %v647 = vld [vmem:[%s646] sm:$0xf]
        %v648 = vld [vmem:[%s434] sm:$0xf]
        %vm649 = vcmask 64512
        %v651 = vsel %vm649, %v641, 0
        %v654 = vsel %vm649, %v648, 0
        %656 = vmatpush.bf16.xpose.msra.mxu0 0
        %657 = vmatpush.bf16.xpose.msra.mxu0 0
        %658 = vmatpush.bf16.xpose.msra.mxu0 0
        %659 = vmatpush.bf16.xpose.msra.mxu0 0
        %660 = vmatpush.bf16.xpose.msra.mxu0 0
        %661 = vmatpush.bf16.xpose.msra.mxu0 0
        %662 = vmatpush.bf16.xpose.msra.mxu0 0
        %663 = vmatpush.bf16.xpose.msra.mxu0 %v654
        %664 = vmatmul.bf16.gmra.mxu0 %v651
        %v665 = vpop.f32.mrf.mxu0
        %v666 = vadd.f32 0.0, %v665
        %v667 = vpop.f32.mrf.mxu0
        %668 = vdwg.mxu0
        %v669 = vlaneseq
        %v670 = vshrl.u32 %v669, 7
        %v671 = vlaneseq
        %v672 = vand.u32 %v671, 127
        %vm673 = vcmp.eq.s32.totalorder %v670, 7
        %v674 = vadd.s32 %v670, 1
        %v675 = vsel %vm673, 0, %v674
        %v676 = vand.u32 %v675, 1
        %vm677 = vcmp.ne.s32.totalorder %v676, 0
        %679 = vrot.lane.b32.xlu0 %v666, 121
        %v680 = vpop.permute.xlu0 %679
        %682 = vrot.lane.b32.xlu0 %v666, 1
        %v683 = vpop.permute.xlu0 %682
        %vm685 = vcmask 7168
        %v686 = vsel %vm685, %v680, %v683
        %v687 = vsel %vm677, %v686, %v666
        %v688 = vand.u32 %v675, 2
        %vm689 = vcmp.ne.s32.totalorder %v688, 0
        %691 = vrot.lane.b32.xlu0 %v687, 122
        %v692 = vpop.permute.xlu0 %691
        %694 = vrot.lane.b32.xlu0 %v687, 2
        %v695 = vpop.permute.xlu0 %694
        %vm697 = vcmask 15360
        %v698 = vsel %vm697, %v692, %v695
        %v699 = vsel %vm689, %v698, %v687
        %v700 = vand.u32 %v675, 4
        %vm701 = vcmp.ne.s32.totalorder %v700, 0
        %703 = vrot.lane.b32.xlu0 %v699, 124
        %v704 = vpop.permute.xlu0 %703
        %706 = vrot.lane.b32.xlu0 %v699, 4
        %v707 = vpop.permute.xlu0 %706
        %vm709 = vcmask 31744
        %v710 = vsel %vm709, %v704, %v707
        %v711 = vsel %vm701, %v710, %v699
        %v713 = vrot.slane %v711, 1
        %vm715 = vcmask 1046528
        %v716 = vsel %vm715, %v713, %v713
        %vm717 = vcmp.eq.s32.totalorder %v672, %v674
        %vm718 = vcmp.le.s32.totalorder %v672, %v670
        %v719 = vsel %vm718, %v711, %v716
        %v720 = vsel %vm717, 0.0, %v719
        %v722 = vsel %vm649, %v635, 0
        %v725 = vsel %vm649, %v644, 0
        %727 = vmatpush.bf16.xpose.msra.mxu0 0
        %728 = vmatpush.bf16.xpose.msra.mxu0 0
        %729 = vmatpush.bf16.xpose.msra.mxu0 0
        %730 = vmatpush.bf16.xpose.msra.mxu0 0
        %731 = vmatpush.bf16.xpose.msra.mxu0 0
        %732 = vmatpush.bf16.xpose.msra.mxu0 0
        %733 = vmatpush.bf16.xpose.msra.mxu0 0
        %734 = vmatpush.bf16.xpose.msra.mxu0 %v725
        %735 = vmatmul.bf16.gmra.mxu0 %v722
        %v736 = vpop.f32.mrf.mxu0
        %v737 = vadd.f32 %v720, %v736
        %v738 = vpop.f32.mrf.mxu0
        %739 = vdwg.mxu0
        %s740 = sld [smem:[#allocation7 + %s40]]
        %v741 = vstv %s740
        %vm742 = vcmp.ge.s32.totalorder %v672, %v741
        %v743 = vsel %vm742, -1e+30, %v737
        %v744 = vsel %vm649, %v743, -inf
        %745 = vmax.xlane.f32.xlu0 %v744
        %v746 = vpop.xlane.xlu0 %745
        %v747 = vsub.f32 %v743, %v746
        %v748 = vmul.f32 %v747, 1.442695
        %v749 = vpow.pop %v748
        %v750 = vsel %vm649, %v749, 0.0
        %751 = vadd.xlane.f32.xlu0 %v750
        %v752 = vpop.xlane.xlu0 %751
        %v753 = vrcp.pop %v752
        %v754 = vmul.f32 %v749, %v753
        %v755 = vpack.c.bf16 %v754, %v754
        %v757 = vsel %vm649, %v755, 0
        %vm759 = vcmask 1043456
        %v761 = vsel %vm759, %v647, 0
        %763 = vmatpush.bf16.msra.mxu0 0
        %764 = vmatpush.bf16.msra.mxu0 0
        %765 = vmatpush.bf16.msra.mxu0 0
        %766 = vmatpush.bf16.msra.mxu0 0
        %767 = vmatpush.bf16.msra.mxu0 0
        %768 = vmatpush.bf16.msra.mxu0 0
        %769 = vmatpush.bf16.msra.mxu0 0
        %770 = vmatpush.bf16.msra.mxu0 %v761
        %771 = vmatmul.bf16.gmra.mxu0 %v757
        %v772 = vpop.f32.mrf.mxu0
        %v773 = vadd.f32 0.0, %v772
        %v774 = vpop.f32.mrf.mxu0
        %775 = vdwg.mxu0
        %s776 = scalar_lea.vmem [#allocation5], %s627
        %777 = vst.msk [vmem:[%s776] sm:$0xff] %vm649, %v773
        %p778 = scmp.eq.s32.totalorder %s41, 3
        // Predicated region
        $region85: #{tpu_custom_call.1} parent=51 // pred_check
          %p779 = pneg %p778
        $region86: #{tpu_custom_call.1} parent=51 // pred_check_branch
          %781 = sbr.rel (%p779) target = $region88
        $region87: #{tpu_custom_call.1} parent=51 // pred_region
          %v782 = vld [vmem:[#allocation5] sm:$0xff]
          %s783 = scalar_lea.vmem [#allocation5], 8
          %v784 = vld [vmem:[%s783] sm:$0xff]
          %s785 = scalar_lea.vmem [#allocation5], 16
          %v786 = vld [vmem:[%s785] sm:$0xff]
          %s787 = scalar_lea.vmem [#allocation5], 24
          %v788 = vld [vmem:[%s787] sm:$0xff]
          %790 = vrot.lane.b32.xlu0 %v784, 8
          %v791 = vpop.permute.xlu0 %790
          %794 = vrot.lane.b32.xlu0 %v786, 16
          %v795 = vpop.permute.xlu0 %794
          %798 = vrot.lane.b32.xlu0 %v788, 24
          %v799 = vpop.permute.xlu0 %798
          %v801 = vsel %vm649, %v782, %v791
          %vm802 = vcmask 130048
          %v803 = vsel %vm802, %v801, %v795
          %vm804 = vcmask 195584
          %v805 = vsel %vm804, %v803, %v799
          %v806 = vpack.c.bf16 %v805, %v805
          %v807 = vld [vmem:[#allocation18] sm:$0xf]
          %v808 = vld [vmem:[#allocation18 + $0x4] sm:$0xf]
          %v809 = vld [vmem:[#allocation18 + $0x8] sm:$0xf]
          %v810 = vld [vmem:[#allocation18 + $0xc] sm:$0xf]
          %v815 = vunpack.c.l.b16 %v807
          %v816 = vunpack.c.l.b16 %v808
          %v817 = vunpack.c.l.b16 %v809
          %v818 = vunpack.c.l.b16 %v810
          %v819 = vpack.c.b16 %v816, %v815
          %v820 = vpack.c.b16 %v818, %v817
          %vm823 = vcmask 261120
          %v825 = vsel %vm823, %v806, 0
          %827 = vmatpush.bf16.msra.mxu0 0
          %828 = vmatpush.bf16.msra.mxu0 0
          %829 = vmatpush.bf16.msra.mxu0 0
          %830 = vmatpush.bf16.msra.mxu0 0
          %831 = vmatpush.bf16.msra.mxu0 0
          %832 = vmatpush.bf16.msra.mxu0 0
          %833 = vmatpush.bf16.msra.mxu0 %v820
          %834 = vmatpush.bf16.msra.mxu0 %v819
          %835 = vmatmul.bf16.gmra.mxu0 %v825
          %v836 = vpop.f32.mrf.mxu0
          %v837 = vadd.f32 0.0, %v836
          %v838 = vpop.f32.mrf.mxu0
          %839 = vdwg.mxu0
          %v840 = vld [vmem:[%s400] sm:$0xff]
          %v841 = vadd.f32 %v840, %v837
          %842 = vst.msk [vmem:[%s484] sm:$0xff] %vm823, %v841
        $region88: #{tpu_custom_call.1} parent=51 // pred_fallthru
          _
        %s843 = sand.u32 %s244, 1
        %s844 = scalar_lea.sflag [#allocation10], %s843
        %s845 = sand.u32 %s244, 1
        %s846 = smul.addr %s845, 8
        %s847 = scalar_lea.vmem [#allocation19], %s846
        // Predicated region
        $region89: #{tpu_custom_call.1} parent=51 // pred_check
          %p848 = pneg %p254
        $region90: #{tpu_custom_call.1} parent=51 // pred_check_branch
          %850 = sbr.rel (%p848) target = $region92
        $region91: #{tpu_custom_call.1} parent=51 // pred_region
          %852 = vsyncadd %s844, 0
          %s853 = smul.addr %s40, 8
          %s854 = scalar_lea.hbm %s9, %s853
          %s856 = sshll.u32 %s847, 4
          %s857 = int_to_ptr.vmem [resolvable:$true] %s856
          %s858 = sshll.u32 %s854, 4
          %s859 = int_to_ptr.hbm [resolvable:$true] %s858
          %861 = dma.vmem_to_hbm [thread:$0]  %s857, 128, %s859, %s844
        $region92: #{tpu_custom_call.1} parent=51 // pred_fallthru
          _
      $region52: #{tpu_custom_call.1} parent=5 // pred_fallthru
        _
      %p862 = scmp.le.s32.totalorder 2, %s31
      // Predicated region
      $region93: #{tpu_custom_call.1} parent=5 // pred_check
        %p863 = pneg %p862
      $region94: #{tpu_custom_call.1} parent=5 // pred_check_branch
        %865 = sbr.rel (%p863) target = $region96
      $region95: #{tpu_custom_call.1} parent=5 // pred_region
        %s866 = ssub.s32 %s31, 2
        // Predicated region
        $region97: #{tpu_custom_call.1} parent=95 // pred_check
          %p867 = pneg %p260
        $region98: #{tpu_custom_call.1} parent=95 // pred_check_branch
          %869 = sbr.rel (%p867) target = $region100
        $region99: #{tpu_custom_call.1} parent=95 // pred_region
          %s870 = sand.u32 %s245, 1
          %s871 = scalar_lea.sflag [#allocation10], %s870
          %s872 = sand.u32 %s245, 1
          %s873 = smul.addr %s872, 8
          %s874 = scalar_lea.vmem [#allocation19], %s873
          %876 = dma.done %s871, 128
        $region100: #{tpu_custom_call.1} parent=95 // pred_fallthru
          _
      $region96: #{tpu_custom_call.1} parent=5 // pred_fallthru
        _
    $region6: #{tpu_custom_call.1} parent=1 // loop_footer
      %s35 = sadd.s32 1, %s31
    $region7: #{tpu_custom_call.1} parent=1 // loop_footer_branch
      %30 = sbr.rel target = $region3
    $region8: #{tpu_custom_call.1} parent=1 // loop_exit
      _
    %877 = vsyncpa [#allocation9], 1
    %s878 = scalar_lea.sflag [#allocation9], 1
    %879 = vsyncpa %s878, 1
    %880 = vsyncpa [#allocation12], 1
    %881 = vsyncpa [#allocation15], 1
    %882 = vsyncpa [#allocation10], 1
    %s883 = scalar_lea.sflag [#allocation10], 1
    %884 = vsyncpa %s883, 1

</llo_original>
